<compile_context>
chip_gen: v6e
topology: v6e:2x2x1
jax: 0.10.0
libtpu: 0.0.40
codegen_flags: <defaults>
</compile_context>

<pallas_src>
import functools
import math

import jax
import jax.numpy as jnp
from jax import lax
from jax.experimental import pallas as pl
from jax.experimental.pallas import tpu as pltpu

# ---------------- configuration (small, synthetic) ----------------
GEN = 4                    # gen not in (8, 9): no gen-specific extra embeddings
N_ACTIVE = 1
T, B, S = 2, 2, 6          # time, batch, party size
ENTITY_DIM = 32            # config.entity_embedding_dim
NUM_HEADS = 2              # config.transformer_num_heads
HEAD_DIM = ENTITY_DIM // NUM_HEADS
NUM_LAYERS = 1             # config.transformer_num_layers
# resblocks_num_before = resblocks_num_after = 1 (baked into the layer code)

N_FEATURES = 24            # 16 scalar token features + 4 moves * (token, pp)

# synthetic vocab / binary-embedding sizes
GENDER_VOCAB = 4           # len(GENDERS) + 1
STATUS_VOCAB = 8           # len(STATUS) + 1
FORME_VOCAB = 16
LEVEL_VOCAB = 102
ABILITY_VOCAB, ABILITY_DIM = 64, 48
POKEDEX_VOCAB, POKEDEX_DIM = 256, 64
ITEM_VOCAB, ITEM_DIM = 64, 48
MOVE_VOCAB, MOVE_DIM = 128, 64

HP_BINS, STAT_BINS, PP_BINS = 2048, 1024, 64
HP_OH_DIM = math.isqrt(HP_BINS - 1) + 1      # 46
STAT_OH_DIM = math.isqrt(STAT_BINS - 1) + 1  # 32
PP_OH_DIM = math.isqrt(PP_BINS - 1) + 1      # 8
MOVE_FEAT_DIM = MOVE_DIM + PP_OH_DIM         # 72

# fused front-end feature-slab width: [direct | hp | stat | ability | pokedex | item | move_sum]
K_FRONT = (ENTITY_DIM + (1 + HP_OH_DIM) + 5 * STAT_OH_DIM
           + ABILITY_DIM + POKEDEX_DIM + ITEM_DIM + MOVE_FEAT_DIM)   # 471


def sqrt_one_hot_matrix(num_embeddings):
    depth = math.isqrt(num_embeddings - 1) + 1
    idx = jnp.floor(jnp.sqrt(jnp.arange(num_embeddings, dtype=jnp.float32)))
    return jax.nn.one_hot(idx.astype(jnp.int32), depth, dtype=jnp.float32)


def _block_diag4(w):
    """4-way block-diagonal replication of a (r, c) weight -> (4r, 4c)."""
    r, c = w.shape
    out = jnp.zeros((4 * r, 4 * c), w.dtype)
    for m in range(4):
        out = out.at[m * r:(m + 1) * r, m * c:(m + 1) * c].set(w)
    return out


# ---------------- the single fused Pallas kernel ----------------
def _fused_private_encoder_kernel(
        feat_ref, mvact_ref, amask_ref, keep_ref, psel_ref,
        wfront_ref, lw_ref, lb_ref, miscw_ref, miscb_ref,
        ent_out_ref, slab_out_ref):
    D = ENTITY_DIM
    dh = HEAD_DIM
    N = T * B
    f32 = jnp.float32

    # ---- fused front end: embedding sum + all feature projections in ONE matmul ----
    x = jnp.dot(feat_ref[...], wfront_ref[...], preferred_element_type=f32)   # (R, D)

    # ---- transformer encoder, all N=T*B sequences flattened (no per-seq reshapes) ----
    # TODO(synk): TransformerEncoder source not provided; standard
    # resblock -> MHA(+residual) -> resblock layer is implemented instead.
    amask = amask_ref[...]            # (R, R) additive mask: block-diag + key padding
    scale = 1.0 / (dh ** 0.5)
    for l in range(NUM_LAYERS):
        W = lw_ref[l]                                                # (D, 8D) packed
        Bv = lb_ref[l]                                               # (4, D) packed biases
        rb_w1 = W[:, 0:D]
        rb_w2 = W[:, D:2 * D]
        wqkv = W[:, 2 * D:5 * D]                                     # fused QKV (D, 3D)
        wo = W[:, 5 * D:6 * D]
        ra_w1 = W[:, 6 * D:7 * D]
        ra_w2 = W[:, 7 * D:8 * D]
        rb_b1 = Bv[0:1]; rb_b2 = Bv[1:2]; ra_b1 = Bv[2:3]; ra_b2 = Bv[3:4]

        # residual MLP block before attention (flattened over N*S rows)
        h = jnp.maximum(jnp.dot(x, rb_w1, preferred_element_type=f32) + rb_b1, 0.0)
        x = x + jnp.dot(h, rb_w2, preferred_element_type=f32) + rb_b2

        # fused QKV projection, one matmul
        qkv = jnp.dot(x, wqkv, preferred_element_type=f32)           # (R, 3D)

        for hh in range(NUM_HEADS):
            q = qkv[:, hh * dh:(hh + 1) * dh]                        # (R, dh)
            k = qkv[:, D + hh * dh:D + (hh + 1) * dh]
            v = qkv[:, 2 * D + hh * dh:2 * D + (hh + 1) * dh]
            # flat 2-D logits; cross-sequence & padded keys killed by the additive mask
            logits = lax.dot_general(q, k, (((1,), (1,)), ((), ())),
                                     preferred_element_type=f32) * scale      # (R, R)
            logits = logits + amask
            logits = logits - jnp.max(logits, axis=-1, keepdims=True)
            p = jnp.exp(logits)
            p = p * pl.reciprocal(jnp.sum(p, axis=-1, keepdims=True), approx=True)
            o = jnp.dot(p, v, preferred_element_type=f32)            # (R, dh)
            # per-head output projection via static row slices of wo (no head concat)
            x = x + jnp.dot(o, wo[hh * dh:(hh + 1) * dh, :], preferred_element_type=f32)

        # residual MLP block after attention
        h2 = jnp.maximum(jnp.dot(x, ra_w1, preferred_element_type=f32) + ra_b1, 0.0)
        x = x + jnp.dot(h2, ra_w2, preferred_element_type=f32) + ra_b2

    # ---- mask + entity-embeddings output ----
    x = x * keep_ref[...]                                            # entity_embeddings * ~mask
    ent_out_ref[...] = x

    # ---- unpack packed small weights (static sublane slices of one slab) ----
    w_outsp = miscw_ref[0:D, :]                                      # (D, 4D) [ToVector | spatial]
    glu_w1t = miscw_ref[D:2 * D, :]                                  # (D, 4D) tiled GLU gate weight
    mv_wblk = miscw_ref[2 * D:2 * D + 4 * MOVE_FEAT_DIM, :]          # (288, 4D) block-diag move proj
    glu_w2b = miscw_ref[2 * D + 4 * MOVE_FEAT_DIM:
                        2 * D + 4 * MOVE_FEAT_DIM + 4 * D, :]        # (4D, 4D) block-diag
    b_outsp = miscb_ref[0:1, :]
    glu_b1t = miscb_ref[1:2, :]
    glu_b2w = miscb_ref[2:3, :]

    psel = psel_ref[...]
    pool = psel[0:2 * N, :]                                          # (2N, R) pooling rows
    sel = psel[2 * N:2 * N + N * N_ACTIVE, :]                        # (N*NA, R) active-entity select

    # ---- ToVector + spatial stand-ins via pooling-matrix matmul -> lane-dense slab ----
    # TODO(synk): ToVector source not provided; mean-pool over entities + Linear + ReLU.
    # TODO(synk): PrivateSpatialEncoder (conv-based) source not provided; masked
    #             mean-pool + Linear + ReLU stand-in with the same interface.
    y = jnp.dot(x, w_outsp, preferred_element_type=f32)              # (R, 4D)
    pooled = jnp.dot(pool, y, preferred_element_type=f32)            # (2N, 4D)
    vec_slab = jnp.maximum(pooled + b_outsp, 0.0)                    # rows 0:N -> out, N:2N -> spatial

    # ---- moves_given_context GLU (AlphaStar-style: Linear(sigmoid(Linear(ctx)) * x)) ----
    # TODO(synk): GLU source not provided; standard gated-linear stand-in.
    ctx = jnp.dot(sel, x, preferred_element_type=f32)                # (N*NA, D) active embeddings
    gate = jax.nn.sigmoid(
        jnp.dot(ctx, glu_w1t, preferred_element_type=f32) + glu_b1t)  # (N*NA, 4D) lane-dense gate
    mv_act = jnp.dot(mvact_ref[...], mv_wblk, preferred_element_type=f32)      # (N*NA, 4D)
    glu_out = jnp.dot(gate * mv_act, glu_w2b, preferred_element_type=f32) + glu_b2w

    slab_out_ref[0:2 * N, :] = vec_slab
    slab_out_ref[2 * N:2 * N + N * N_ACTIVE, :] = glu_out


# ---------------- pallas_call helper ----------------
def _full_spec(shape):
    nd = len(shape)
    return pl.BlockSpec(shape, lambda i, _nd=nd: (0,) * _nd)


# ---------------- parameters (pre-packed for the fused kernel) ----------------
def init_params(key):
    ks = iter(jax.random.split(key, 64))
    D = ENTITY_DIM

    def w(shape, scale=0.05):
        return scale * jax.random.normal(next(ks), shape, dtype=jnp.float32)

    p = {}
    # direct embedding tables (nn.Embedding)
    p["active"] = w((3, D))
    p["fainted"] = w((3, D))
    p["gender"] = w((GENDER_VOCAB, D))
    p["status"] = w((STATUS_VOCAB, D))
    p["forme"] = w((FORME_VOCAB, D))
    p["level"] = w((LEVEL_VOCAB, D))
    # embedding sub-module tables (stand-ins for MoveEmbedding/AbilityEmbedding/...)
    p["move_table"] = w((MOVE_VOCAB, MOVE_DIM))
    p["ability_table"] = w((ABILITY_VOCAB, ABILITY_DIM))
    p["pokedex_table"] = w((POKEDEX_VOCAB, POKEDEX_DIM))
    p["item_table"] = w((ITEM_VOCAB, ITEM_DIM))

    # feature projections (nn.Linear, no bias): stored as (in, out)
    hp_w = w((1 + HP_OH_DIM, D))
    stat_w = w((5 * STAT_OH_DIM, D))
    ability_w = w((ABILITY_DIM, D))
    pokedex_w = w((POKEDEX_DIM, D))
    item_w = w((ITEM_DIM, D))
    move_w = w((MOVE_FEAT_DIM, D))
    # ONE front-end weight: [I_D; hp; stat; ability; pokedex; item; move] -> (K_FRONT, D)
    p["w_front"] = jnp.concatenate(
        [jnp.eye(D, dtype=jnp.float32), hp_w, stat_w, ability_w, pokedex_w, item_w, move_w],
        axis=0)

    # transformer layers, packed: columns [rb_w1|rb_w2|wq|wk|wv|wo|ra_w1|ra_w2]
    lws, lbs = [], []
    for _ in range(NUM_LAYERS):
        cols = [w((D, D)) for _ in range(8)]
        lws.append(jnp.concatenate(cols, axis=1))          # (D, 8D)
        lbs.append(jnp.zeros((4, D), jnp.float32))         # [rb_b1; rb_b2; ra_b1; ra_b2]
    p["layer_w"] = jnp.stack(lws, axis=0)                  # (L, D, 8D)
    p["layer_b"] = jnp.stack(lbs, axis=0)                  # (L, 4, D)

    # misc weight slab (480, 4D): [ToVector|spatial (D,4D); GLU w1 tiled (D,4D);
    #                              block-diag move proj (288,4D); block-diag GLU w2 (4D,4D)]
    w_out = w((D, 2 * D))
    w_sp = w((D, 2 * D))
    glu_w1 = w((D, D))
    glu_w2 = w((D, D))
    p["misc_w"] = jnp.concatenate(
        [jnp.concatenate([w_out, w_sp], axis=1),
         jnp.tile(glu_w1, (1, 4)),
         _block_diag4(move_w),
         _block_diag4(glu_w2)], axis=0)                    # (480, 128)
    # misc bias slab (4, 4D): [out|spatial bias; GLU b1 tiled; GLU b2 wide; pad]
    p["misc_b"] = jnp.zeros((4, 4 * D), jnp.float32)
    return p


# ---------------- forward ----------------
def private_encoder_forward(params, tables, private_reserve):
    hp_sqrt, stat_sqrt, pp_sqrt = tables
    D = ENTITY_DIM
    R = T * B * S
    N = T * B
    f32 = jnp.float32

    x = private_reserve + 1
    ability = x[..., 0]; active = x[..., 1]; fainted = x[..., 2]; gender = x[..., 3]
    hp = x[..., 4]; item = x[..., 5]; level = x[..., 6]; maxhp = x[..., 7]
    name = x[..., 8]; forme = x[..., 9]
    stat_atk = x[..., 10]; stat_def = x[..., 11]; stat_spa = x[..., 12]
    stat_spd = x[..., 13]; stat_spe = x[..., 14]; status = x[..., 15]
    moves_tok = x[..., -8:].reshape(x.shape[:-1] + (4, 2))
    move_tokens = moves_tok[..., 0]
    move_used = moves_tok[..., 1]

    # -------- embedding-table gathers (data-dependent; plain-JAX glue) --------
    direct_sum = (params["active"][active] + params["fainted"][fainted]
                  + params["gender"][gender] + params["level"][level]
                  + params["forme"][forme] + params["status"][status]).reshape(R, D)

    # hp ratio on shifted values, matching the reference (x = private_reserve + 1)
    hp_ratio = (hp.astype(f32) / jnp.maximum(maxhp, 1).astype(f32))[..., None]
    hp_feat = jnp.concatenate([hp_ratio, hp_sqrt[hp]], axis=-1).reshape(R, 1 + HP_OH_DIM)
    stat_feat = jnp.concatenate([stat_sqrt[stat_atk], stat_sqrt[stat_def],
                                 stat_sqrt[stat_spa], stat_sqrt[stat_spd],
                                 stat_sqrt[stat_spe]], axis=-1).reshape(R, 5 * STAT_OH_DIM)
    ability_raw = params["ability_table"][ability].reshape(R, ABILITY_DIM)
    pokedex_raw = params["pokedex_table"][name].reshape(R, POKEDEX_DIM)
    item_raw = params["item_table"][item].reshape(R, ITEM_DIM)

    move_feat = jnp.concatenate(
        [params["move_table"][move_tokens], pp_sqrt[move_used]], axis=-1)   # (T,B,S,4,72)
    # move Linear has no bias -> W(sum_m feat_m) == sum_m W(feat_m): pre-sum wrapper-side
    move_sum = move_feat.sum(-2).reshape(R, MOVE_FEAT_DIM)                  # (R, 72)
    # per-move features needed only for the active entities (GLU input)
    mv_feat_active = move_feat[:, :, :N_ACTIVE].reshape(N * N_ACTIVE, 4 * MOVE_FEAT_DIM)

    # ONE front-end activation slab (column order matches w_front rows)
    feat_slab = jnp.concatenate(
        [direct_sum, hp_feat, stat_feat, ability_raw, pokedex_raw, item_raw, move_sum],
        axis=-1)                                                            # (R, K_FRONT)

    # -------- masks --------
    mask = (name == 0) | (fainted == 2)                      # (T, B, S) bool
    mask2 = mask.reshape(N, S)
    encoder_mask = mask2.at[:, 0].set(False)
    enc_flat = encoder_mask.reshape(R)
    keep_flat = (~mask2).reshape(R).astype(f32)
    keep_full = jnp.broadcast_to(keep_flat[:, None], (R, D))  # (R, D)

    # block-diagonal additive attention mask: -1e9 across sequences / on masked keys
    seq_id = jnp.arange(R, dtype=jnp.int32) // S
    same_seq = seq_id[:, None] == seq_id[None, :]
    attn_mask = jnp.where(same_seq & (~enc_flat)[None, :], 0.0, -1e9).astype(f32)  # (R, R)

    # pooling matrix (exact divides here, not in-kernel):
    #  rows 0:N    -> ToVector mean over all S entities (1/S)
    #  rows N:2N   -> spatial masked mean (keep / valid-count)
    #  rows 2N:2N+N*NA -> active-entity selection rows for the GLU context
    seq_oh = (seq_id[None, :] == jnp.arange(N, dtype=jnp.int32)[:, None]).astype(f32)  # (N, R)
    counts = jnp.maximum(keep_flat.reshape(N, S).sum(-1), 1.0)                          # (N,)
    pool_out = seq_oh * (1.0 / S)
    pool_sp = seq_oh * keep_flat[None, :] / counts[:, None]
    act_rows = (jnp.arange(N)[:, None] * S + jnp.arange(N_ACTIVE)[None, :]).reshape(-1)
    sel = jax.nn.one_hot(act_rows, R, dtype=f32)                                        # (N*NA, R)
    psel = jnp.concatenate([pool_out, pool_sp, sel], axis=0)    # (2N + N*NA, R)

    # -------- single fused Pallas call (10 inputs, 2 outputs) --------
    inputs = [feat_slab, mv_feat_active, attn_mask, keep_full, psel,
              params["w_front"], params["layer_w"], params["layer_b"],
              params["misc_w"], params["misc_b"]]

    out_shapes = (jax.ShapeDtypeStruct((R, D), f32),
                  jax.ShapeDtypeStruct((2 * N + N * N_ACTIVE, 4 * D), f32))

    ent_flat, slab = pl.pallas_call(
        _fused_private_encoder_kernel,
        grid=(1,),
        in_specs=[_full_spec(a.shape) for a in inputs],
        out_specs=tuple(_full_spec(s.shape) for s in out_shapes),
        out_shape=out_shapes,
        compiler_params=pltpu.CompilerParams(dimension_semantics=("arbitrary",)),
    )(*inputs)

    entity_embeddings = ent_flat.reshape(T, B, S, D)
    entity_embedding = slab[0:N, 0:2 * D].reshape(T, B, 2 * D)
    spatial_embedding = slab[N:2 * N, 2 * D:4 * D].reshape(T, B, 2 * D)
    moves_out = slab[2 * N:2 * N + N * N_ACTIVE, :].reshape(T, B, N_ACTIVE, 4, D)
    return entity_embedding, spatial_embedding, moves_out, entity_embeddings


# ---------------- main ----------------
if __name__ == "__main__":
    params = init_params(jax.random.PRNGKey(42))
    tables = (sqrt_one_hot_matrix(HP_BINS),
              sqrt_one_hot_matrix(STAT_BINS),
              sqrt_one_hot_matrix(PP_BINS))

    # deterministic example input: (T, B, S, 24) int32 token tensor, valid ranges
    feat_ranges = [
        (-1, ABILITY_VOCAB - 1),   # ability
        (-1, 2),                   # active
        (-1, 2),                   # fainted
        (-1, GENDER_VOCAB - 1),    # gender
        (0, 501),                  # hp
        (-1, ITEM_VOCAB - 1),      # item
        (0, 101),                  # level
        (100, 501),                # maxhp
        (-1, POKEDEX_VOCAB - 1),   # name (can be -1 -> masked slot)
        (-1, FORME_VOCAB - 1),     # forme
        (0, 801), (0, 801), (0, 801), (0, 801), (0, 801),   # stats
        (-1, STATUS_VOCAB - 1),    # status
    ] + [(-1, MOVE_VOCAB - 1), (0, 63)] * 4                  # 4 x (move token, pp)

    key = jax.random.PRNGKey(0)
    fkeys = jax.random.split(key, N_FEATURES)
    cols = [jax.random.randint(fk, (T, B, S), lo, hi, dtype=jnp.int32)
            for fk, (lo, hi) in zip(fkeys, feat_ranges)]
    private_reserve = jnp.stack(cols, axis=-1)

    fwd = jax.jit(functools.partial(private_encoder_forward, params, tables))
    outs = fwd(private_reserve)
    jax.block_until_ready(outs)

    ent_vec, spatial_vec, moves_ctx, ent_embs = outs
    assert ent_vec.shape == (T, B, 2 * ENTITY_DIM)
    assert spatial_vec.shape == (T, B, 2 * ENTITY_DIM)
    assert moves_ctx.shape == (T, B, N_ACTIVE, 4, ENTITY_DIM)
    assert ent_embs.shape == (T, B, S, ENTITY_DIM)
    print("KERNEL_OK")
</pallas_src>

<mosaic_0001>
module attributes {stable_mosaic.version = 11 : i64} {
  func.func @_fused_private_encoder_kernel(%arg0: i32, %arg1: memref<24x471xf32, #tpu.memory_space<vmem>>, %arg2: memref<4x288xf32, #tpu.memory_space<vmem>>, %arg3: memref<24x24xf32, #tpu.memory_space<vmem>>, %arg4: memref<24x32xf32, #tpu.memory_space<vmem>>, %arg5: memref<12x24xf32, #tpu.memory_space<vmem>>, %arg6: memref<471x32xf32, #tpu.memory_space<vmem>>, %arg7: memref<1x32x256xf32, #tpu.memory_space<vmem>>, %arg8: memref<1x4x32xf32, #tpu.memory_space<vmem>>, %arg9: memref<480x128xf32, #tpu.memory_space<vmem>>, %arg10: memref<4x128xf32, #tpu.memory_space<vmem>>, %arg11: memref<24x32xf32, #tpu.memory_space<vmem>>, %arg12: memref<12x128xf32, #tpu.memory_space<vmem>>) attributes {dimension_semantics = [#tpu.dimension_semantics<arbitrary>], iteration_bounds = array<i64: 1>, scalar_prefetch = 0 : i64, scratch_operands = 0 : i64, tpu.core_type = #tpu.core_type<tc>, window_params = [{pipeline_mode = #tpu.pipeline_mode<synchronous>, transform_indices = @transform_0, window_bounds = array<i64: 24, 471>}, {pipeline_mode = #tpu.pipeline_mode<synchronous>, transform_indices = @transform_1, window_bounds = array<i64: 4, 288>}, {pipeline_mode = #tpu.pipeline_mode<synchronous>, transform_indices = @transform_2, window_bounds = array<i64: 24, 24>}, {pipeline_mode = #tpu.pipeline_mode<synchronous>, transform_indices = @transform_3, window_bounds = array<i64: 24, 32>}, {pipeline_mode = #tpu.pipeline_mode<synchronous>, transform_indices = @transform_4, window_bounds = array<i64: 12, 24>}, {pipeline_mode = #tpu.pipeline_mode<synchronous>, transform_indices = @transform_5, window_bounds = array<i64: 471, 32>}, {pipeline_mode = #tpu.pipeline_mode<synchronous>, transform_indices = @transform_6, window_bounds = array<i64: 1, 32, 256>}, {pipeline_mode = #tpu.pipeline_mode<synchronous>, transform_indices = @transform_7, window_bounds = array<i64: 1, 4, 32>}, {pipeline_mode = #tpu.pipeline_mode<synchronous>, transform_indices = @transform_8, window_bounds = array<i64: 480, 128>}, {pipeline_mode = #tpu.pipeline_mode<synchronous>, transform_indices = @transform_9, window_bounds = array<i64: 4, 128>}, {pipeline_mode = #tpu.pipeline_mode<synchronous>, transform_indices = @transform_10, window_bounds = array<i64: 24, 32>}, {pipeline_mode = #tpu.pipeline_mode<synchronous>, transform_indices = @transform_11, window_bounds = array<i64: 12, 128>}]} {
    %c0 = arith.constant 0 : index
    %c0_0 = arith.constant 0 : index
    %0 = vector.load %arg1[%c0, %c0_0] : memref<24x471xf32, #tpu.memory_space<vmem>>, vector<24x471xf32>
    %c0_1 = arith.constant 0 : index
    %c0_2 = arith.constant 0 : index
    %1 = vector.load %arg6[%c0_1, %c0_2] : memref<471x32xf32, #tpu.memory_space<vmem>>, vector<471x32xf32>
    %cst = arith.constant dense<0.000000e+00> : vector<24x32xf32>
    %2 = tpu.matmul %0, %1, %cst {dimension_numbers = #tpu.dot_dimension_numbers<[1], [0], [0], [1], [0, 0, 1, 1], [], []>} : vector<24x471xf32>, vector<471x32xf32>, vector<24x32xf32> -> vector<24x32xf32>
    %c0_3 = arith.constant 0 : index
    %c0_4 = arith.constant 0 : index
    %3 = vector.load %arg3[%c0_3, %c0_4] : memref<24x24xf32, #tpu.memory_space<vmem>>, vector<24x24xf32>
    %c0_5 = arith.constant 0 : index
    %c0_6 = arith.constant 0 : index
    %c0_7 = arith.constant 0 : index
    %4 = vector.load %arg7[%c0_5, %c0_6, %c0_7] : memref<1x32x256xf32, #tpu.memory_space<vmem>>, vector<1x32x256xf32>
    %5 = vector.shape_cast %4 : vector<1x32x256xf32> to vector<32x256xf32>
    %c0_8 = arith.constant 0 : index
    %c0_9 = arith.constant 0 : index
    %c0_10 = arith.constant 0 : index
    %6 = vector.load %arg8[%c0_8, %c0_9, %c0_10] : memref<1x4x32xf32, #tpu.memory_space<vmem>>, vector<1x4x32xf32>
    %7 = vector.shape_cast %6 : vector<1x4x32xf32> to vector<4x32xf32>
    %8 = vector.extract_strided_slice %5 {offsets = [0, 0], sizes = [32, 32], strides = [1, 1]} : vector<32x256xf32> to vector<32x32xf32>
    %9 = vector.extract_strided_slice %5 {offsets = [0, 32], sizes = [32, 32], strides = [1, 1]} : vector<32x256xf32> to vector<32x32xf32>
    %10 = vector.extract_strided_slice %5 {offsets = [0, 64], sizes = [32, 96], strides = [1, 1]} : vector<32x256xf32> to vector<32x96xf32>
    %11 = vector.extract_strided_slice %5 {offsets = [0, 160], sizes = [32, 32], strides = [1, 1]} : vector<32x256xf32> to vector<32x32xf32>
    %12 = vector.extract_strided_slice %5 {offsets = [0, 192], sizes = [32, 32], strides = [1, 1]} : vector<32x256xf32> to vector<32x32xf32>
    %13 = vector.extract_strided_slice %5 {offsets = [0, 224], sizes = [32, 32], strides = [1, 1]} : vector<32x256xf32> to vector<32x32xf32>
    %14 = vector.extract_strided_slice %7 {offsets = [0, 0], sizes = [1, 32], strides = [1, 1]} : vector<4x32xf32> to vector<1x32xf32>
    %15 = vector.extract_strided_slice %7 {offsets = [1, 0], sizes = [1, 32], strides = [1, 1]} : vector<4x32xf32> to vector<1x32xf32>
    %16 = vector.extract_strided_slice %7 {offsets = [2, 0], sizes = [1, 32], strides = [1, 1]} : vector<4x32xf32> to vector<1x32xf32>
    %17 = vector.extract_strided_slice %7 {offsets = [3, 0], sizes = [1, 32], strides = [1, 1]} : vector<4x32xf32> to vector<1x32xf32>
    %cst_11 = arith.constant dense<0.000000e+00> : vector<24x32xf32>
    %18 = tpu.matmul %2, %8, %cst_11 {dimension_numbers = #tpu.dot_dimension_numbers<[1], [0], [0], [1], [0, 0, 1, 1], [], []>} : vector<24x32xf32>, vector<32x32xf32>, vector<24x32xf32> -> vector<24x32xf32>
    %19 = vector.broadcast %14 : vector<1x32xf32> to vector<24x32xf32>
    %20 = arith.addf %18, %19 : vector<24x32xf32>
    %cst_12 = arith.constant 0.000000e+00 : f32
    %21 = vector.broadcast %cst_12 : f32 to vector<24x32xf32>
    %22 = arith.maximumf %20, %21 : vector<24x32xf32>
    %cst_13 = arith.constant dense<0.000000e+00> : vector<24x32xf32>
    %23 = tpu.matmul %22, %9, %cst_13 {dimension_numbers = #tpu.dot_dimension_numbers<[1], [0], [0], [1], [0, 0, 1, 1], [], []>} : vector<24x32xf32>, vector<32x32xf32>, vector<24x32xf32> -> vector<24x32xf32>
    %24 = arith.addf %2, %23 : vector<24x32xf32>
    %25 = vector.broadcast %15 : vector<1x32xf32> to vector<24x32xf32>
    %26 = arith.addf %24, %25 : vector<24x32xf32>
    %cst_14 = arith.constant dense<0.000000e+00> : vector<24x96xf32>
    %27 = tpu.matmul %26, %10, %cst_14 {dimension_numbers = #tpu.dot_dimension_numbers<[1], [0], [0], [1], [0, 0, 1, 1], [], []>} : vector<24x32xf32>, vector<32x96xf32>, vector<24x96xf32> -> vector<24x96xf32>
    %28 = vector.extract_strided_slice %27 {offsets = [0, 0], sizes = [24, 16], strides = [1, 1]} : vector<24x96xf32> to vector<24x16xf32>
    %29 = vector.extract_strided_slice %27 {offsets = [0, 32], sizes = [24, 16], strides = [1, 1]} : vector<24x96xf32> to vector<24x16xf32>
    %30 = vector.extract_strided_slice %27 {offsets = [0, 64], sizes = [24, 16], strides = [1, 1]} : vector<24x96xf32> to vector<24x16xf32>
    %cst_15 = arith.constant dense<0.000000e+00> : vector<24x24xf32>
    %31 = tpu.matmul %28, %29, %cst_15 {dimension_numbers = #tpu.dot_dimension_numbers<[1], [1], [0], [0], [0, 0, 1, 0], [], []>} : vector<24x16xf32>, vector<24x16xf32>, vector<24x24xf32> -> vector<24x24xf32>
    %cst_16 = arith.constant 2.500000e-01 : f32
    %32 = vector.broadcast %cst_16 : f32 to vector<24x24xf32>
    %33 = arith.mulf %31, %32 : vector<24x24xf32>
    %34 = arith.addf %33, %3 : vector<24x24xf32>
    %cst_17 = arith.constant dense<0xFF800000> : vector<24xf32>
    %35 = vector.multi_reduction <maximumf>, %34, %cst_17 [1] : vector<24x24xf32> to vector<24xf32>
    %36 = vector.shape_cast %35 : vector<24xf32> to vector<24x1xf32>
    %37 = vector.broadcast %36 : vector<24x1xf32> to vector<24x24xf32>
    %38 = arith.subf %34, %37 : vector<24x24xf32>
    %39 = math.exp %38 : vector<24x24xf32>
    %cst_18 = arith.constant dense<0.000000e+00> : vector<24xf32>
    %40 = vector.multi_reduction <add>, %39, %cst_18 [1] : vector<24x24xf32> to vector<24xf32>
    %41 = vector.shape_cast %40 : vector<24xf32> to vector<24x1xf32>
    %42 = tpu.reciprocal %41 {approx = true} : vector<24x1xf32> -> vector<24x1xf32>
    %43 = vector.broadcast %42 : vector<24x1xf32> to vector<24x24xf32>
    %44 = arith.mulf %39, %43 : vector<24x24xf32>
    %cst_19 = arith.constant dense<0.000000e+00> : vector<24x16xf32>
    %45 = tpu.matmul %44, %30, %cst_19 {dimension_numbers = #tpu.dot_dimension_numbers<[1], [0], [0], [1], [0, 0, 1, 1], [], []>} : vector<24x24xf32>, vector<24x16xf32>, vector<24x16xf32> -> vector<24x16xf32>
    %46 = vector.extract_strided_slice %11 {offsets = [0, 0], sizes = [16, 32], strides = [1, 1]} : vector<32x32xf32> to vector<16x32xf32>
    %cst_20 = arith.constant dense<0.000000e+00> : vector<24x32xf32>
    %47 = tpu.matmul %45, %46, %cst_20 {dimension_numbers = #tpu.dot_dimension_numbers<[1], [0], [0], [1], [0, 0, 1, 1], [], []>} : vector<24x16xf32>, vector<16x32xf32>, vector<24x32xf32> -> vector<24x32xf32>
    %48 = arith.addf %26, %47 : vector<24x32xf32>
    %49 = vector.extract_strided_slice %27 {offsets = [0, 16], sizes = [24, 16], strides = [1, 1]} : vector<24x96xf32> to vector<24x16xf32>
    %50 = vector.extract_strided_slice %27 {offsets = [0, 48], sizes = [24, 16], strides = [1, 1]} : vector<24x96xf32> to vector<24x16xf32>
    %51 = vector.extract_strided_slice %27 {offsets = [0, 80], sizes = [24, 16], strides = [1, 1]} : vector<24x96xf32> to vector<24x16xf32>
    %cst_21 = arith.constant dense<0.000000e+00> : vector<24x24xf32>
    %52 = tpu.matmul %49, %50, %cst_21 {dimension_numbers = #tpu.dot_dimension_numbers<[1], [1], [0], [0], [0, 0, 1, 0], [], []>} : vector<24x16xf32>, vector<24x16xf32>, vector<24x24xf32> -> vector<24x24xf32>
    %cst_22 = arith.constant 2.500000e-01 : f32
    %53 = vector.broadcast %cst_22 : f32 to vector<24x24xf32>
    %54 = arith.mulf %52, %53 : vector<24x24xf32>
    %55 = arith.addf %54, %3 : vector<24x24xf32>
    %cst_23 = arith.constant dense<0xFF800000> : vector<24xf32>
    %56 = vector.multi_reduction <maximumf>, %55, %cst_23 [1] : vector<24x24xf32> to vector<24xf32>
    %57 = vector.shape_cast %56 : vector<24xf32> to vector<24x1xf32>
    %58 = vector.broadcast %57 : vector<24x1xf32> to vector<24x24xf32>
    %59 = arith.subf %55, %58 : vector<24x24xf32>
    %60 = math.exp %59 : vector<24x24xf32>
    %cst_24 = arith.constant dense<0.000000e+00> : vector<24xf32>
    %61 = vector.multi_reduction <add>, %60, %cst_24 [1] : vector<24x24xf32> to vector<24xf32>
    %62 = vector.shape_cast %61 : vector<24xf32> to vector<24x1xf32>
    %63 = tpu.reciprocal %62 {approx = true} : vector<24x1xf32> -> vector<24x1xf32>
    %64 = vector.broadcast %63 : vector<24x1xf32> to vector<24x24xf32>
    %65 = arith.mulf %60, %64 : vector<24x24xf32>
    %cst_25 = arith.constant dense<0.000000e+00> : vector<24x16xf32>
    %66 = tpu.matmul %65, %51, %cst_25 {dimension_numbers = #tpu.dot_dimension_numbers<[1], [0], [0], [1], [0, 0, 1, 1], [], []>} : vector<24x24xf32>, vector<24x16xf32>, vector<24x16xf32> -> vector<24x16xf32>
    %67 = vector.extract_strided_slice %11 {offsets = [16, 0], sizes = [16, 32], strides = [1, 1]} : vector<32x32xf32> to vector<16x32xf32>
    %cst_26 = arith.constant dense<0.000000e+00> : vector<24x32xf32>
    %68 = tpu.matmul %66, %67, %cst_26 {dimension_numbers = #tpu.dot_dimension_numbers<[1], [0], [0], [1], [0, 0, 1, 1], [], []>} : vector<24x16xf32>, vector<16x32xf32>, vector<24x32xf32> -> vector<24x32xf32>
    %69 = arith.addf %48, %68 : vector<24x32xf32>
    %cst_27 = arith.constant dense<0.000000e+00> : vector<24x32xf32>
    %70 = tpu.matmul %69, %12, %cst_27 {dimension_numbers = #tpu.dot_dimension_numbers<[1], [0], [0], [1], [0, 0, 1, 1], [], []>} : vector<24x32xf32>, vector<32x32xf32>, vector<24x32xf32> -> vector<24x32xf32>
    %71 = vector.broadcast %16 : vector<1x32xf32> to vector<24x32xf32>
    %72 = arith.addf %70, %71 : vector<24x32xf32>
    %cst_28 = arith.constant 0.000000e+00 : f32
    %73 = vector.broadcast %cst_28 : f32 to vector<24x32xf32>
    %74 = arith.maximumf %72, %73 : vector<24x32xf32>
    %cst_29 = arith.constant dense<0.000000e+00> : vector<24x32xf32>
    %75 = tpu.matmul %74, %13, %cst_29 {dimension_numbers = #tpu.dot_dimension_numbers<[1], [0], [0], [1], [0, 0, 1, 1], [], []>} : vector<24x32xf32>, vector<32x32xf32>, vector<24x32xf32> -> vector<24x32xf32>
    %76 = arith.addf %69, %75 : vector<24x32xf32>
    %77 = vector.broadcast %17 : vector<1x32xf32> to vector<24x32xf32>
    %78 = arith.addf %76, %77 : vector<24x32xf32>
    %c0_30 = arith.constant 0 : index
    %c0_31 = arith.constant 0 : index
    %79 = vector.load %arg4[%c0_30, %c0_31] : memref<24x32xf32, #tpu.memory_space<vmem>>, vector<24x32xf32>
    %80 = arith.mulf %78, %79 : vector<24x32xf32>
    %c0_32 = arith.constant 0 : index
    %c0_33 = arith.constant 0 : index
    %81 = vector.load %arg11[%c0_32, %c0_33] : memref<24x32xf32, #tpu.memory_space<vmem>>, vector<24x32xf32>
    tpu.vector_store %arg11[%c0_32, %c0_33], %80 {strides = array<i32>} : memref<24x32xf32, #tpu.memory_space<vmem>>, vector<24x32xf32>,
    %c0_34 = arith.constant 0 : index
    %c0_35 = arith.constant 0 : index
    %82 = vector.load %arg9[%c0_34, %c0_35] : memref<480x128xf32, #tpu.memory_space<vmem>>, vector<32x128xf32>
    %c32 = arith.constant 32 : index
    %c0_36 = arith.constant 0 : index
    %83 = vector.load %arg9[%c32, %c0_36] : memref<480x128xf32, #tpu.memory_space<vmem>>, vector<32x128xf32>
    %c64 = arith.constant 64 : index
    %c0_37 = arith.constant 0 : index
    %84 = vector.load %arg9[%c64, %c0_37] : memref<480x128xf32, #tpu.memory_space<vmem>>, vector<288x128xf32>
    %c352 = arith.constant 352 : index
    %c0_38 = arith.constant 0 : index
    %85 = vector.load %arg9[%c352, %c0_38] : memref<480x128xf32, #tpu.memory_space<vmem>>, vector<128x128xf32>
    %c0_39 = arith.constant 0 : index
    %c0_40 = arith.constant 0 : index
    %86 = vector.load %arg10[%c0_39, %c0_40] : memref<4x128xf32, #tpu.memory_space<vmem>>, vector<1x128xf32>
    %c1 = arith.constant 1 : index
    %c0_41 = arith.constant 0 : index
    %87 = vector.load %arg10[%c1, %c0_41] : memref<4x128xf32, #tpu.memory_space<vmem>>, vector<1x128xf32>
    %c2 = arith.constant 2 : index
    %c0_42 = arith.constant 0 : index
    %88 = vector.load %arg10[%c2, %c0_42] : memref<4x128xf32, #tpu.memory_space<vmem>>, vector<1x128xf32>
    %c0_43 = arith.constant 0 : index
    %c0_44 = arith.constant 0 : index
    %89 = vector.load %arg5[%c0_43, %c0_44] : memref<12x24xf32, #tpu.memory_space<vmem>>, vector<12x24xf32>
    %90 = vector.extract_strided_slice %89 {offsets = [0, 0], sizes = [8, 24], strides = [1, 1]} : vector<12x24xf32> to vector<8x24xf32>
    %91 = vector.extract_strided_slice %89 {offsets = [8, 0], sizes = [4, 24], strides = [1, 1]} : vector<12x24xf32> to vector<4x24xf32>
    %cst_45 = arith.constant dense<0.000000e+00> : vector<24x128xf32>
    %92 = tpu.matmul %80, %82, %cst_45 {dimension_numbers = #tpu.dot_dimension_numbers<[1], [0], [0], [1], [0, 0, 1, 1], [], []>} : vector<24x32xf32>, vector<32x128xf32>, vector<24x128xf32> -> vector<24x128xf32>
    %cst_46 = arith.constant dense<0.000000e+00> : vector<8x128xf32>
    %93 = tpu.matmul %90, %92, %cst_46 {dimension_numbers = #tpu.dot_dimension_numbers<[1], [0], [0], [1], [0, 0, 1, 1], [], []>} : vector<8x24xf32>, vector<24x128xf32>, vector<8x128xf32> -> vector<8x128xf32>
    %94 = vector.broadcast %86 : vector<1x128xf32> to vector<8x128xf32>
    %95 = arith.addf %93, %94 : vector<8x128xf32>
    %cst_47 = arith.constant 0.000000e+00 : f32
    %96 = vector.broadcast %cst_47 : f32 to vector<8x128xf32>
    %97 = arith.maximumf %95, %96 : vector<8x128xf32>
    %cst_48 = arith.constant dense<0.000000e+00> : vector<4x32xf32>
    %98 = tpu.matmul %91, %80, %cst_48 {dimension_numbers = #tpu.dot_dimension_numbers<[1], [0], [0], [1], [0, 0, 1, 1], [], []>} : vector<4x24xf32>, vector<24x32xf32>, vector<4x32xf32> -> vector<4x32xf32>
    %cst_49 = arith.constant dense<0.000000e+00> : vector<4x128xf32>
    %99 = tpu.matmul %98, %83, %cst_49 {dimension_numbers = #tpu.dot_dimension_numbers<[1], [0], [0], [1], [0, 0, 1, 1], [], []>} : vector<4x32xf32>, vector<32x128xf32>, vector<4x128xf32> -> vector<4x128xf32>
    %100 = vector.broadcast %87 : vector<1x128xf32> to vector<4x128xf32>
    %101 = arith.addf %99, %100 : vector<4x128xf32>
    %102 = arith.negf %101 : vector<4x128xf32>
    %103 = math.exp %102 : vector<4x128xf32>
    %cst_50 = arith.constant 1.000000e+00 : f32
    %104 = vector.broadcast %cst_50 : f32 to vector<4x128xf32>
    %105 = arith.addf %104, %103 : vector<4x128xf32>
    %106 = arith.divf %104, %105 : vector<4x128xf32>
    %c0_51 = arith.constant 0 : index
    %c0_52 = arith.constant 0 : index
    %107 = vector.load %arg2[%c0_51, %c0_52] : memref<4x288xf32, #tpu.memory_space<vmem>>, vector<4x288xf32>
    %cst_53 = arith.constant dense<0.000000e+00> : vector<4x128xf32>
    %108 = tpu.matmul %107, %84, %cst_53 {dimension_numbers = #tpu.dot_dimension_numbers<[1], [0], [0], [1], [0, 0, 1, 1], [], []>} : vector<4x288xf32>, vector<288x128xf32>, vector<4x128xf32> -> vector<4x128xf32>
    %109 = arith.mulf %106, %108 : vector<4x128xf32>
    %cst_54 = arith.constant dense<0.000000e+00> : vector<4x128xf32>
    %110 = tpu.matmul %109, %85, %cst_54 {dimension_numbers = #tpu.dot_dimension_numbers<[1], [0], [0], [1], [0, 0, 1, 1], [], []>} : vector<4x128xf32>, vector<128x128xf32>, vector<4x128xf32> -> vector<4x128xf32>
    %111 = vector.broadcast %88 : vector<1x128xf32> to vector<4x128xf32>
    %112 = arith.addf %110, %111 : vector<4x128xf32>
    %c0_55 = arith.constant 0 : index
    %c0_56 = arith.constant 0 : index
    %113 = vector.load %arg12[%c0_55, %c0_56] : memref<12x128xf32, #tpu.memory_space<vmem>>, vector<8x128xf32>
    tpu.vector_store %arg12[%c0_55, %c0_56], %97 {strides = array<i32>} : memref<12x128xf32, #tpu.memory_space<vmem>>, vector<8x128xf32>,
    %c8 = arith.constant 8 : index
    %c0_57 = arith.constant 0 : index
    %114 = vector.load %arg12[%c8, %c0_57] : memref<12x128xf32, #tpu.memory_space<vmem>>, vector<4x128xf32>
    tpu.vector_store %arg12[%c8, %c0_57], %112 {strides = array<i32>} : memref<12x128xf32, #tpu.memory_space<vmem>>, vector<4x128xf32>,
    return
  }
  func.func @transform_0(%arg0: i32) -> (i32, i32) {
    %c0_i32 = arith.constant 0 : i32
    %c0_i32_0 = arith.constant 0 : i32
    %c0_i32_1 = arith.constant 0 : i32
    return %c0_i32, %c0_i32_0 : i32, i32
  }
  func.func @transform_1(%arg0: i32) -> (i32, i32) {
    %c0_i32 = arith.constant 0 : i32
    %c0_i32_0 = arith.constant 0 : i32
    %c0_i32_1 = arith.constant 0 : i32
    return %c0_i32, %c0_i32_0 : i32, i32
  }
  func.func @transform_2(%arg0: i32) -> (i32, i32) {
    %c0_i32 = arith.constant 0 : i32
    %c0_i32_0 = arith.constant 0 : i32
    %c0_i32_1 = arith.constant 0 : i32
    return %c0_i32, %c0_i32_0 : i32, i32
  }
  func.func @transform_3(%arg0: i32) -> (i32, i32) {
    %c0_i32 = arith.constant 0 : i32
    %c0_i32_0 = arith.constant 0 : i32
    %c0_i32_1 = arith.constant 0 : i32
    return %c0_i32, %c0_i32_0 : i32, i32
  }
  func.func @transform_4(%arg0: i32) -> (i32, i32) {
    %c0_i32 = arith.constant 0 : i32
    %c0_i32_0 = arith.constant 0 : i32
    %c0_i32_1 = arith.constant 0 : i32
    return %c0_i32, %c0_i32_0 : i32, i32
  }
  func.func @transform_5(%arg0: i32) -> (i32, i32) {
    %c0_i32 = arith.constant 0 : i32
    %c0_i32_0 = arith.constant 0 : i32
    %c0_i32_1 = arith.constant 0 : i32
    return %c0_i32, %c0_i32_0 : i32, i32
  }
  func.func @transform_6(%arg0: i32) -> (i32, i32, i32) {
    %c0_i32 = arith.constant 0 : i32
    %c0_i32_0 = arith.constant 0 : i32
    %c0_i32_1 = arith.constant 0 : i32
    %c0_i32_2 = arith.constant 0 : i32
    return %c0_i32, %c0_i32_0, %c0_i32_1 : i32, i32, i32
  }
  func.func @transform_7(%arg0: i32) -> (i32, i32, i32) {
    %c0_i32 = arith.constant 0 : i32
    %c0_i32_0 = arith.constant 0 : i32
    %c0_i32_1 = arith.constant 0 : i32
    %c0_i32_2 = arith.constant 0 : i32
    return %c0_i32, %c0_i32_0, %c0_i32_1 : i32, i32, i32
  }
  func.func @transform_8(%arg0: i32) -> (i32, i32) {
    %c0_i32 = arith.constant 0 : i32
    %c0_i32_0 = arith.constant 0 : i32
    %c0_i32_1 = arith.constant 0 : i32
    return %c0_i32, %c0_i32_0 : i32, i32
  }
  func.func @transform_9(%arg0: i32) -> (i32, i32) {
    %c0_i32 = arith.constant 0 : i32
    %c0_i32_0 = arith.constant 0 : i32
    %c0_i32_1 = arith.constant 0 : i32
    return %c0_i32, %c0_i32_0 : i32, i32
  }
  func.func @transform_10(%arg0: i32) -> (i32, i32) {
    %c0_i32 = arith.constant 0 : i32
    %c0_i32_0 = arith.constant 0 : i32
    %c0_i32_1 = arith.constant 0 : i32
    return %c0_i32, %c0_i32_0 : i32, i32
  }
  func.func @transform_11(%arg0: i32) -> (i32, i32) {
    %c0_i32 = arith.constant 0 : i32
    %c0_i32_0 = arith.constant 0 : i32
    %c0_i32_1 = arith.constant 0 : i32
    return %c0_i32, %c0_i32_0 : i32, i32
  }
}

</mosaic_0001>

<llo_original>
// kernel: private_encoder_forward.1
$region0: #{private_encoder_forward.1}
  #allocation0 [shape = 'u32[]', space=smem, size = 0x4, offset = 0x4, fixed_abs, tag = 'smem constant byte address 0x4 - core index']
  #allocation1 [shape = 'u32[144,128]{1,0:T(1,128)}', space=vmem, size = 0x12000, scoped, tag = 'internal scratch']
  %s0 = inlined_call_operand.vmem [shape: f32[24,471], index: 0, kind: input, shape index: {}]
  %s1 = inlined_call_operand.vmem [shape: f32[4,288], index: 1, kind: input, shape index: {}]
  %s2 = inlined_call_operand.vmem [shape: f32[24,24], index: 2, kind: input, shape index: {}]
  %s3 = inlined_call_operand.vmem [shape: f32[24,32], index: 3, kind: input, shape index: {}]
  %s4 = inlined_call_operand.vmem [shape: f32[12,24], index: 4, kind: input, shape index: {}]
  %s5 = inlined_call_operand.vmem [shape: f32[471,32], index: 5, kind: input, shape index: {}]
  %s6 = inlined_call_operand.vmem [shape: f32[1,32,256], index: 6, kind: input, shape index: {}]
  %s7 = inlined_call_operand.vmem [shape: f32[1,4,32], index: 7, kind: input, shape index: {}]
  %s8 = inlined_call_operand.vmem [shape: f32[480,128], index: 8, kind: input, shape index: {}]
  %s9 = inlined_call_operand.vmem [shape: f32[4,128], index: 9, kind: input, shape index: {}]
  %s10 = inlined_call_operand.vmem [shape: f32[24,32], index: 10, kind: output, shape index: {0}]
  %s11 = inlined_call_operand.vmem [shape: f32[12,128], index: 11, kind: output, shape index: {1}]
  %12 = xla_tuple %s10, %s11
  %s13 = sld [smem:[#allocation0]]
  $region58: #{private_encoder_forward.1} parent=0
    _
  %s15 = ssub.s32 1, %s13
  %s16 = scalar_select 0, %s15, %s13
  // Predicated region
  $region2: #{private_encoder_forward.1} parent=0 // pred_check
    _
  $region3: #{private_encoder_forward.1} parent=0 // pred_check_branch
    %18 = sbr.rel (0) target = $region5
  $region4: #{private_encoder_forward.1} parent=0 // pred_region
    _
  $region5: #{private_encoder_forward.1} parent=0 // pred_fallthru
    _
  // Predicated region
  $region6: #{private_encoder_forward.1} parent=0 // pred_check
    _
  $region7: #{private_encoder_forward.1} parent=0 // pred_check_branch
    %20 = sbr.rel (0) target = $region9
  $region8: #{private_encoder_forward.1} parent=0 // pred_region
    _
  $region9: #{private_encoder_forward.1} parent=0 // pred_fallthru
    _
  // Predicated region
  $region10: #{private_encoder_forward.1} parent=0 // pred_check
    _
  $region11: #{private_encoder_forward.1} parent=0 // pred_check_branch
    %22 = sbr.rel (0) target = $region13
  $region12: #{private_encoder_forward.1} parent=0 // pred_region
    _
  $region13: #{private_encoder_forward.1} parent=0 // pred_fallthru
    _
  // Predicated region
  $region14: #{private_encoder_forward.1} parent=0 // pred_check
    _
  $region15: #{private_encoder_forward.1} parent=0 // pred_check_branch
    %24 = sbr.rel (0) target = $region17
  $region16: #{private_encoder_forward.1} parent=0 // pred_region
    _
  $region17: #{private_encoder_forward.1} parent=0 // pred_fallthru
    _
  // Predicated region
  $region18: #{private_encoder_forward.1} parent=0 // pred_check
    _
  $region19: #{private_encoder_forward.1} parent=0 // pred_check_branch
    %26 = sbr.rel (0) target = $region21
  $region20: #{private_encoder_forward.1} parent=0 // pred_region
    _
  $region21: #{private_encoder_forward.1} parent=0 // pred_fallthru
    _
  // Predicated region
  $region22: #{private_encoder_forward.1} parent=0 // pred_check
    _
  $region23: #{private_encoder_forward.1} parent=0 // pred_check_branch
    %28 = sbr.rel (0) target = $region25
  $region24: #{private_encoder_forward.1} parent=0 // pred_region
    _
  $region25: #{private_encoder_forward.1} parent=0 // pred_fallthru
    _
  // Predicated region
  $region26: #{private_encoder_forward.1} parent=0 // pred_check
    _
  $region27: #{private_encoder_forward.1} parent=0 // pred_check_branch
    %30 = sbr.rel (0) target = $region29
  $region28: #{private_encoder_forward.1} parent=0 // pred_region
    _
  $region29: #{private_encoder_forward.1} parent=0 // pred_fallthru
    _
  // Predicated region
  $region30: #{private_encoder_forward.1} parent=0 // pred_check
    _
  $region31: #{private_encoder_forward.1} parent=0 // pred_check_branch
    %32 = sbr.rel (0) target = $region33
  $region32: #{private_encoder_forward.1} parent=0 // pred_region
    _
  $region33: #{private_encoder_forward.1} parent=0 // pred_fallthru
    _
  // Predicated region
  $region34: #{private_encoder_forward.1} parent=0 // pred_check
    _
  $region35: #{private_encoder_forward.1} parent=0 // pred_check_branch
    %34 = sbr.rel (0) target = $region37
  $region36: #{private_encoder_forward.1} parent=0 // pred_region
    _
  $region37: #{private_encoder_forward.1} parent=0 // pred_fallthru
    _
  // Predicated region
  $region38: #{private_encoder_forward.1} parent=0 // pred_check
    _
  $region39: #{private_encoder_forward.1} parent=0 // pred_check_branch
    %36 = sbr.rel (0) target = $region41
  $region40: #{private_encoder_forward.1} parent=0 // pred_region
    _
  $region41: #{private_encoder_forward.1} parent=0 // pred_fallthru
    _
  %v37 = vld [vmem:[%s0] sm:$0xff]
  %v38 = vld [vmem:[%s0 + $0x8] sm:$0xff]
  %v39 = vld [vmem:[%s0 + $0x10] sm:$0xff]
  %v40 = vld [vmem:[%s0 + $0x18] sm:$0xff]
  %v41 = vld [vmem:[%s0 + $0x20] sm:$0xff]
  %v42 = vld [vmem:[%s0 + $0x28] sm:$0xff]
  %v43 = vld [vmem:[%s0 + $0x30] sm:$0xff]
  %v44 = vld [vmem:[%s0 + $0x38] sm:$0xff]
  %v45 = vld [vmem:[%s0 + $0x40] sm:$0xff]
  %v46 = vld [vmem:[%s0 + $0x48] sm:$0xff]
  %v47 = vld [vmem:[%s0 + $0x50] sm:$0xff]
  %v48 = vld [vmem:[%s0 + $0x58] sm:$0xff]
  %v49 = vld [vmem:[%s5] sm:$0xff]
  %v50 = vld [vmem:[%s5 + $0x8] sm:$0xff]
  %v51 = vld [vmem:[%s5 + $0x10] sm:$0xff]
  %v52 = vld [vmem:[%s5 + $0x18] sm:$0xff]
  %v53 = vld [vmem:[%s5 + $0x20] sm:$0xff]
  %v54 = vld [vmem:[%s5 + $0x28] sm:$0xff]
  %v55 = vld [vmem:[%s5 + $0x30] sm:$0xff]
  %v56 = vld [vmem:[%s5 + $0x38] sm:$0xff]
  %v57 = vld [vmem:[%s5 + $0x40] sm:$0xff]
  %v58 = vld [vmem:[%s5 + $0x48] sm:$0xff]
  %v59 = vld [vmem:[%s5 + $0x50] sm:$0xff]
  %v60 = vld [vmem:[%s5 + $0x58] sm:$0xff]
  %v61 = vld [vmem:[%s5 + $0x60] sm:$0xff]
  %v62 = vld [vmem:[%s5 + $0x68] sm:$0xff]
  %v63 = vld [vmem:[%s5 + $0x70] sm:$0xff]
  %v64 = vld [vmem:[%s5 + $0x78] sm:$0xff]
  %v65 = vld [vmem:[%s5 + $0x80] sm:$0xff]
  %v66 = vld [vmem:[%s5 + $0x88] sm:$0xff]
  %v67 = vld [vmem:[%s5 + $0x90] sm:$0xff]
  %v68 = vld [vmem:[%s5 + $0x98] sm:$0xff]
  %v69 = vld [vmem:[%s5 + $0xa0] sm:$0xff]
  %v70 = vld [vmem:[%s5 + $0xa8] sm:$0xff]
  %v71 = vld [vmem:[%s5 + $0xb0] sm:$0xff]
  %v72 = vld [vmem:[%s5 + $0xb8] sm:$0xff]
  %v73 = vld [vmem:[%s5 + $0xc0] sm:$0xff]
  %v74 = vld [vmem:[%s5 + $0xc8] sm:$0xff]
  %v75 = vld [vmem:[%s5 + $0xd0] sm:$0xff]
  %v76 = vld [vmem:[%s5 + $0xd8] sm:$0xff]
  %v77 = vld [vmem:[%s5 + $0xe0] sm:$0xff]
  %v78 = vld [vmem:[%s5 + $0xe8] sm:$0xff]
  %v79 = vld [vmem:[%s5 + $0xf0] sm:$0xff]
  %v80 = vld [vmem:[%s5 + $0xf8] sm:$0xff]
  %v81 = vld [vmem:[%s5 + $0x100] sm:$0xff]
  %v82 = vld [vmem:[%s5 + $0x108] sm:$0xff]
  %v83 = vld [vmem:[%s5 + $0x110] sm:$0xff]
  %v84 = vld [vmem:[%s5 + $0x118] sm:$0xff]
  %v85 = vld [vmem:[%s5 + $0x120] sm:$0xff]
  %v86 = vld [vmem:[%s5 + $0x128] sm:$0xff]
  %v87 = vld [vmem:[%s5 + $0x130] sm:$0xff]
  %v88 = vld [vmem:[%s5 + $0x138] sm:$0xff]
  %v89 = vld [vmem:[%s5 + $0x140] sm:$0xff]
  %v90 = vld [vmem:[%s5 + $0x148] sm:$0xff]
  %v91 = vld [vmem:[%s5 + $0x150] sm:$0xff]
  %v92 = vld [vmem:[%s5 + $0x158] sm:$0xff]
  %v93 = vld [vmem:[%s5 + $0x160] sm:$0xff]
  %v94 = vld [vmem:[%s5 + $0x168] sm:$0xff]
  %v95 = vld [vmem:[%s5 + $0x170] sm:$0xff]
  %v96 = vld [vmem:[%s5 + $0x178] sm:$0xff]
  %v97 = vld [vmem:[%s5 + $0x180] sm:$0xff]
  %v98 = vld [vmem:[%s5 + $0x188] sm:$0xff]
  %v99 = vld [vmem:[%s5 + $0x190] sm:$0xff]
  %v100 = vld [vmem:[%s5 + $0x198] sm:$0xff]
  %v101 = vld [vmem:[%s5 + $0x1a0] sm:$0xff]
  %v102 = vld [vmem:[%s5 + $0x1a8] sm:$0xff]
  %v103 = vld [vmem:[%s5 + $0x1b0] sm:$0xff]
  %v104 = vld [vmem:[%s5 + $0x1b8] sm:$0xff]
  %v105 = vld [vmem:[%s5 + $0x1c0] sm:$0xff]
  %v106 = vld [vmem:[%s5 + $0x1c8] sm:$0xff]
  %v107 = vld [vmem:[%s5 + $0x1d0] sm:$0x7f]
  %vm108 = vcmask 711680
  %v110 = vsel %vm108, %v40, 0
  %v113 = vsel %vm108, %v44, 0
  %v116 = vsel %vm108, %v48, 0
  %vm118 = vcmask 1046528
  %v120 = vsel %vm118, %v107, 0
  %122 = vmatprep.subr.mxu0 0.0
  %123 = vmatpush1.msra.mxu0 %v64
  %124 = vmatprep.subr.mxu0 0.0
  %125 = vmatpush1.msra.mxu0 %v63
  %126 = vmatprep.subr.mxu0 0.0
  %127 = vmatpush1.msra.mxu0 %v62
  %128 = vmatprep.subr.mxu0 0.0
  %129 = vmatpush1.msra.mxu0 %v61
  %130 = vmatprep.subr.mxu0 0.0
  %131 = vmatpush1.msra.mxu0 %v60
  %132 = vmatprep.subr.mxu0 0.0
  %133 = vmatpush1.msra.mxu0 %v59
  %134 = vmatprep.subr.mxu0 0.0
  %135 = vmatpush1.msra.mxu0 %v58
  %136 = vmatprep.subr.mxu0 0.0
  %137 = vmatpush1.msra.mxu0 %v57
  %138 = vmatprep.subr.mxu0 0.0
  %139 = vmatpush1.msra.mxu0 %v56
  %140 = vmatprep.subr.mxu0 0.0
  %141 = vmatpush1.msra.mxu0 %v55
  %142 = vmatprep.subr.mxu0 0.0
  %143 = vmatpush1.msra.mxu0 %v54
  %144 = vmatprep.subr.mxu0 0.0
  %145 = vmatpush1.msra.mxu0 %v53
  %146 = vmatprep.subr.mxu0 0.0
  %147 = vmatpush1.msra.mxu0 %v52
  %148 = vmatprep.subr.mxu0 0.0
  %149 = vmatpush1.msra.mxu0 %v51
  %150 = vmatprep.subr.mxu0 0.0
  %151 = vmatpush1.msra.mxu0 %v50
  %152 = vmatprep.subr.mxu0 0.0
  %153 = vmatpush1.msra.mxu0 %v49
  %154 = vmatprep.subr.mxu0 0.0
  %155 = vmatpush2.msra.mxu0 %v80
  %156 = vmatprep.subr.mxu0 0.0
  %157 = vmatpush2.msra.mxu0 %v79
  %158 = vmatprep.subr.mxu0 0.0
  %159 = vmatpush2.msra.mxu0 %v78
  %160 = vmatprep.subr.mxu0 0.0
  %161 = vmatpush2.msra.mxu0 %v77
  %162 = vmatprep.subr.mxu0 0.0
  %163 = vmatpush2.msra.mxu0 %v76
  %164 = vmatprep.subr.mxu0 0.0
  %165 = vmatpush2.msra.mxu0 %v75
  %166 = vmatprep.subr.mxu0 0.0
  %167 = vmatpush2.msra.mxu0 %v74
  %168 = vmatprep.subr.mxu0 0.0
  %169 = vmatpush2.msra.mxu0 %v73
  %170 = vmatprep.subr.mxu0 0.0
  %171 = vmatpush2.msra.mxu0 %v72
  %172 = vmatprep.subr.mxu0 0.0
  %173 = vmatpush2.msra.mxu0 %v71
  %174 = vmatprep.subr.mxu0 0.0
  %175 = vmatpush2.msra.mxu0 %v70
  %176 = vmatprep.subr.mxu0 0.0
  %177 = vmatpush2.msra.mxu0 %v69
  %178 = vmatprep.subr.mxu0 0.0
  %179 = vmatpush2.msra.mxu0 %v68
  %180 = vmatprep.subr.mxu0 0.0
  %181 = vmatpush2.msra.mxu0 %v67
  %182 = vmatprep.subr.mxu0 0.0
  %183 = vmatpush2.msra.mxu0 %v66
  %184 = vmatprep.subr.mxu0 0.0
  %185 = vmatpush2.msra.mxu0 %v65
  %186 = vmatprep.mubr.f32.mxu0 %v38
  %187 = vmatmul.mubr.f32.gmra.mxu0 %v37
  %v188 = vpop.f32.mrf.mxu0
  %v189 = vadd.f32 0.0, %v188
  %v190 = vpop.f32.mrf.mxu0
  %191 = vmatprep.mubr.f32.mxu0 %v42
  %192 = vmatmul.mubr.f32.gmra.mxu0 %v41
  %v193 = vpop.f32.mrf.mxu0
  %v194 = vadd.f32 0.0, %v193
  %v195 = vpop.f32.mrf.mxu0
  %196 = vmatprep.mubr.f32.mxu0 %v46
  %197 = vmatmul.mubr.f32.gmra.mxu0 %v45
  %v198 = vpop.f32.mrf.mxu0
  %v199 = vadd.f32 0.0, %v198
  %v200 = vpop.f32.mrf.mxu0
  %201 = vdwg.mxu0
  %202 = vmatprep.subr.mxu0 0.0
  %203 = vmatpush1.msra.mxu0 %v96
  %204 = vmatprep.subr.mxu0 0.0
  %205 = vmatpush1.msra.mxu0 %v95
  %206 = vmatprep.subr.mxu0 0.0
  %207 = vmatpush1.msra.mxu0 %v94
  %208 = vmatprep.subr.mxu0 0.0
  %209 = vmatpush1.msra.mxu0 %v93
  %210 = vmatprep.subr.mxu0 0.0
  %211 = vmatpush1.msra.mxu0 %v92
  %212 = vmatprep.subr.mxu0 0.0
  %213 = vmatpush1.msra.mxu0 %v91
  %214 = vmatprep.subr.mxu0 0.0
  %215 = vmatpush1.msra.mxu0 %v90
  %216 = vmatprep.subr.mxu0 0.0
  %217 = vmatpush1.msra.mxu0 %v89
  %218 = vmatprep.subr.mxu0 0.0
  %219 = vmatpush1.msra.mxu0 %v88
  %220 = vmatprep.subr.mxu0 0.0
  %221 = vmatpush1.msra.mxu0 %v87
  %222 = vmatprep.subr.mxu0 0.0
  %223 = vmatpush1.msra.mxu0 %v86
  %224 = vmatprep.subr.mxu0 0.0
  %225 = vmatpush1.msra.mxu0 %v85
  %226 = vmatprep.subr.mxu0 0.0
  %227 = vmatpush1.msra.mxu0 %v84
  %228 = vmatprep.subr.mxu0 0.0
  %229 = vmatpush1.msra.mxu0 %v83
  %230 = vmatprep.subr.mxu0 0.0
  %231 = vmatpush1.msra.mxu0 %v82
  %232 = vmatprep.subr.mxu0 0.0
  %233 = vmatpush1.msra.mxu0 %v81
  %234 = vmatprep.subr.mxu0 0.0
  %235 = vmatpush2.msra.mxu0 0.0
  %236 = vmatprep.subr.mxu0 0.0
  %237 = vmatpush2.msra.mxu0 0.0
  %238 = vmatprep.subr.mxu0 0.0
  %239 = vmatpush2.msra.mxu0 0.0
  %240 = vmatprep.subr.mxu0 0.0
  %241 = vmatpush2.msra.mxu0 0.0
  %242 = vmatprep.subr.mxu0 0.0
  %243 = vmatpush2.msra.mxu0 0.0
  %244 = vmatprep.subr.mxu0 0.0
  %245 = vmatpush2.msra.mxu0 %v120
  %246 = vmatprep.subr.mxu0 0.0
  %247 = vmatpush2.msra.mxu0 %v106
  %248 = vmatprep.subr.mxu0 0.0
  %249 = vmatpush2.msra.mxu0 %v105
  %250 = vmatprep.subr.mxu0 0.0
  %251 = vmatpush2.msra.mxu0 %v104
  %252 = vmatprep.subr.mxu0 0.0
  %253 = vmatpush2.msra.mxu0 %v103
  %254 = vmatprep.subr.mxu0 0.0
  %255 = vmatpush2.msra.mxu0 %v102
  %256 = vmatprep.subr.mxu0 0.0
  %257 = vmatpush2.msra.mxu0 %v101
  %258 = vmatprep.subr.mxu0 0.0
  %259 = vmatpush2.msra.mxu0 %v100
  %260 = vmatprep.subr.mxu0 0.0
  %261 = vmatpush2.msra.mxu0 %v99
  %262 = vmatprep.subr.mxu0 0.0
  %263 = vmatpush2.msra.mxu0 %v98
  %264 = vmatprep.subr.mxu0 0.0
  %265 = vmatpush2.msra.mxu0 %v97
  %266 = vmatprep.mubr.f32.mxu0 %v110
  %267 = vmatmul.mubr.f32.gmra.mxu0 %v39
  %v268 = vpop.f32.mrf.mxu0
  %v269 = vadd.f32 %v189, %v268
  %v270 = vpop.f32.mrf.mxu0
  %271 = vmatprep.mubr.f32.mxu0 %v113
  %272 = vmatmul.mubr.f32.gmra.mxu0 %v43
  %v273 = vpop.f32.mrf.mxu0
  %v274 = vadd.f32 %v194, %v273
  %v275 = vpop.f32.mrf.mxu0
  %276 = vmatprep.mubr.f32.mxu0 %v116
  %277 = vmatmul.mubr.f32.gmra.mxu0 %v47
  %v278 = vpop.f32.mrf.mxu0
  %v279 = vadd.f32 %v199, %v278
  %v280 = vpop.f32.mrf.mxu0
  %281 = vdwg.mxu0
  %v282 = vld [vmem:[%s2] sm:$0xff]
  %v283 = vld [vmem:[%s2 + $0x8] sm:$0xff]
  %v284 = vld [vmem:[%s2 + $0x10] sm:$0xff]
  %v285 = vld [vmem:[%s6] sm:$0xff]
  %v286 = vld [vmem:[%s6 + $0x8] sm:$0xff]
  %v287 = vld [vmem:[%s6 + $0x10] sm:$0xff]
  %v288 = vld [vmem:[%s6 + $0x18] sm:$0xff]
  %v289 = vld [vmem:[%s6 + $0x20] sm:$0xff]
  %v290 = vld [vmem:[%s6 + $0x28] sm:$0xff]
  %v291 = vld [vmem:[%s6 + $0x30] sm:$0xff]
  %v292 = vld [vmem:[%s6 + $0x38] sm:$0xff]
  %v293 = vld [vmem:[%s7] sm:$0xf]
  %v294 = vlaneseq
  %v295 = vshrl.u32 %v294, 7
  %v296 = vsub.s32 0, %v295
  %v297 = vrot.slane %v293, %v296
  %vm298 = vcmask 261120
  %v300 = vsel %vm298, %v269, 0
  %v303 = vsel %vm298, %v274, 0
  %v306 = vsel %vm298, %v279, 0
  %308 = vmatprep.subr.mxu0 0.0
  %309 = vmatpush1.msra.mxu0 0.0
  %310 = vmatprep.subr.mxu0 0.0
  %311 = vmatpush1.msra.mxu0 0.0
  %312 = vmatprep.subr.mxu0 0.0
  %313 = vmatpush1.msra.mxu0 0.0
  %314 = vmatprep.subr.mxu0 0.0
  %315 = vmatpush1.msra.mxu0 0.0
  %316 = vmatprep.subr.mxu0 0.0
  %317 = vmatpush1.msra.mxu0 0.0
  %318 = vmatprep.subr.mxu0 0.0
  %319 = vmatpush1.msra.mxu0 0.0
  %320 = vmatprep.subr.mxu0 0.0
  %321 = vmatpush1.msra.mxu0 0.0
  %322 = vmatprep.subr.mxu0 0.0
  %323 = vmatpush1.msra.mxu0 0.0
  %324 = vmatprep.subr.mxu0 0.0
  %325 = vmatpush1.msra.mxu0 0.0
  %326 = vmatprep.subr.mxu0 0.0
  %327 = vmatpush1.msra.mxu0 0.0
  %328 = vmatprep.subr.mxu0 0.0
  %329 = vmatpush1.msra.mxu0 0.0
  %330 = vmatprep.subr.mxu0 0.0
  %331 = vmatpush1.msra.mxu0 0.0
  %332 = vmatprep.subr.mxu0 0.0
  %333 = vmatpush1.msra.mxu0 %v291
  %334 = vmatprep.subr.mxu0 0.0
  %335 = vmatpush1.msra.mxu0 %v289
  %336 = vmatprep.subr.mxu0 0.0
  %337 = vmatpush1.msra.mxu0 %v287
  %338 = vmatprep.subr.mxu0 0.0
  %339 = vmatpush1.msra.mxu0 %v285
  %340 = vmatprep.subr.mxu0 0.0
  %341 = vmatpush2.msra.mxu0 0.0
  %342 = vmatprep.subr.mxu0 0.0
  %343 = vmatpush2.msra.mxu0 0.0
  %344 = vmatprep.subr.mxu0 0.0
  %345 = vmatpush2.msra.mxu0 0.0
  %346 = vmatprep.subr.mxu0 0.0
  %347 = vmatpush2.msra.mxu0 0.0
  %348 = vmatprep.subr.mxu0 0.0
  %349 = vmatpush2.msra.mxu0 0.0
  %350 = vmatprep.subr.mxu0 0.0
  %351 = vmatpush2.msra.mxu0 0.0
  %352 = vmatprep.subr.mxu0 0.0
  %353 = vmatpush2.msra.mxu0 0.0
  %354 = vmatprep.subr.mxu0 0.0
  %355 = vmatpush2.msra.mxu0 0.0
  %356 = vmatprep.subr.mxu0 0.0
  %357 = vmatpush2.msra.mxu0 0.0
  %358 = vmatprep.subr.mxu0 0.0
  %359 = vmatpush2.msra.mxu0 0.0
  %360 = vmatprep.subr.mxu0 0.0
  %361 = vmatpush2.msra.mxu0 0.0
  %362 = vmatprep.subr.mxu0 0.0
  %363 = vmatpush2.msra.mxu0 0.0
  %364 = vmatprep.subr.mxu0 0.0
  %365 = vmatpush2.msra.mxu0 0.0
  %366 = vmatprep.subr.mxu0 0.0
  %367 = vmatpush2.msra.mxu0 0.0
  %368 = vmatprep.subr.mxu0 0.0
  %369 = vmatpush2.msra.mxu0 0.0
  %370 = vmatprep.subr.mxu0 0.0
  %371 = vmatpush2.msra.mxu0 0.0
  %372 = vmatprep.mubr.f32.mxu0 0.0
  %373 = vmatmul.mubr.f32.gmra.mxu0 %v300
  %v374 = vpop.f32.mrf.mxu0
  %v375 = vadd.f32 %v297, %v374
  %v376 = vpop.f32.mrf.mxu0
  %377 = vmatprep.mubr.f32.mxu0 0.0
  %378 = vmatmul.mubr.f32.gmra.mxu0 %v303
  %v379 = vpop.f32.mrf.mxu0
  %v380 = vadd.f32 %v297, %v379
  %v381 = vpop.f32.mrf.mxu0
  %382 = vmatprep.mubr.f32.mxu0 0.0
  %383 = vmatmul.mubr.f32.gmra.mxu0 %v306
  %v384 = vpop.f32.mrf.mxu0
  %v385 = vadd.f32 %v297, %v384
  %v386 = vpop.f32.mrf.mxu0
  %387 = vdwg.mxu0
  %v388 = vmax.f32 %v375, 0.0
  %v389 = vmax.f32 %v380, 0.0
  %v390 = vmax.f32 %v385, 0.0
  %395 = vrot.lane.b32.xlu0 %v285, 96
  %v396 = vpop.permute.xlu0 %395
  %397 = vrot.lane.b32.xlu0 %v287, 96
  %v398 = vpop.permute.xlu0 %397
  %399 = vrot.lane.b32.xlu0 %v289, 96
  %v400 = vpop.permute.xlu0 %399
  %401 = vrot.lane.b32.xlu0 %v291, 96
  %v402 = vpop.permute.xlu0 %401
  %v408 = vsel %vm298, %v388, 0
  %v411 = vsel %vm298, %v389, 0
  %v414 = vsel %vm298, %v390, 0
  %416 = vmatprep.subr.mxu0 0.0
  %417 = vmatpush1.msra.mxu0 0.0
  %418 = vmatprep.subr.mxu0 0.0
  %419 = vmatpush1.msra.mxu0 0.0
  %420 = vmatprep.subr.mxu0 0.0
  %421 = vmatpush1.msra.mxu0 0.0
  %422 = vmatprep.subr.mxu0 0.0
  %423 = vmatpush1.msra.mxu0 0.0
  %424 = vmatprep.subr.mxu0 0.0
  %425 = vmatpush1.msra.mxu0 0.0
  %426 = vmatprep.subr.mxu0 0.0
  %427 = vmatpush1.msra.mxu0 0.0
  %428 = vmatprep.subr.mxu0 0.0
  %429 = vmatpush1.msra.mxu0 0.0
  %430 = vmatprep.subr.mxu0 0.0
  %431 = vmatpush1.msra.mxu0 0.0
  %432 = vmatprep.subr.mxu0 0.0
  %433 = vmatpush1.msra.mxu0 0.0
  %434 = vmatprep.subr.mxu0 0.0
  %435 = vmatpush1.msra.mxu0 0.0
  %436 = vmatprep.subr.mxu0 0.0
  %437 = vmatpush1.msra.mxu0 0.0
  %438 = vmatprep.subr.mxu0 0.0
  %439 = vmatpush1.msra.mxu0 0.0
  %440 = vmatprep.subr.mxu0 0.0
  %441 = vmatpush1.msra.mxu0 %v402
  %442 = vmatprep.subr.mxu0 0.0
  %443 = vmatpush1.msra.mxu0 %v400
  %444 = vmatprep.subr.mxu0 0.0
  %445 = vmatpush1.msra.mxu0 %v398
  %446 = vmatprep.subr.mxu0 0.0
  %447 = vmatpush1.msra.mxu0 %v396
  %448 = vmatprep.subr.mxu0 0.0
  %449 = vmatpush2.msra.mxu0 0.0
  %450 = vmatprep.subr.mxu0 0.0
  %451 = vmatpush2.msra.mxu0 0.0
  %452 = vmatprep.subr.mxu0 0.0
  %453 = vmatpush2.msra.mxu0 0.0
  %454 = vmatprep.subr.mxu0 0.0
  %455 = vmatpush2.msra.mxu0 0.0
  %456 = vmatprep.subr.mxu0 0.0
  %457 = vmatpush2.msra.mxu0 0.0
  %458 = vmatprep.subr.mxu0 0.0
  %459 = vmatpush2.msra.mxu0 0.0
  %460 = vmatprep.subr.mxu0 0.0
  %461 = vmatpush2.msra.mxu0 0.0
  %462 = vmatprep.subr.mxu0 0.0
  %463 = vmatpush2.msra.mxu0 0.0
  %464 = vmatprep.subr.mxu0 0.0
  %465 = vmatpush2.msra.mxu0 0.0
  %466 = vmatprep.subr.mxu0 0.0
  %467 = vmatpush2.msra.mxu0 0.0
  %468 = vmatprep.subr.mxu0 0.0
  %469 = vmatpush2.msra.mxu0 0.0
  %470 = vmatprep.subr.mxu0 0.0
  %471 = vmatpush2.msra.mxu0 0.0
  %472 = vmatprep.subr.mxu0 0.0
  %473 = vmatpush2.msra.mxu0 0.0
  %474 = vmatprep.subr.mxu0 0.0
  %475 = vmatpush2.msra.mxu0 0.0
  %476 = vmatprep.subr.mxu0 0.0
  %477 = vmatpush2.msra.mxu0 0.0
  %478 = vmatprep.subr.mxu0 0.0
  %479 = vmatpush2.msra.mxu0 0.0
  %480 = vmatprep.mubr.f32.mxu0 0.0
  %481 = vmatmul.mubr.f32.gmra.mxu0 %v408
  %v482 = vpop.f32.mrf.mxu0
  %v483 = vadd.f32 0.0, %v482
  %v484 = vpop.f32.mrf.mxu0
  %485 = vmatprep.mubr.f32.mxu0 0.0
  %486 = vmatmul.mubr.f32.gmra.mxu0 %v411
  %v487 = vpop.f32.mrf.mxu0
  %v488 = vadd.f32 0.0, %v487
  %v489 = vpop.f32.mrf.mxu0
  %490 = vmatprep.mubr.f32.mxu0 0.0
  %491 = vmatmul.mubr.f32.gmra.mxu0 %v414
  %v492 = vpop.f32.mrf.mxu0
  %v493 = vadd.f32 0.0, %v492
  %v494 = vpop.f32.mrf.mxu0
  %495 = vdwg.mxu0
  %v496 = vadd.f32 %v269, %v483
  %v497 = vadd.f32 %v274, %v488
  %v498 = vadd.f32 %v279, %v493
  %v499 = vlaneseq
  %v500 = vshrl.u32 %v499, 7
  %v501 = vsub.s32 1, %v500
  %v502 = vrot.slane %v293, %v501
  %v503 = vadd.f32 %v496, %v502
  %v504 = vadd.f32 %v497, %v502
  %v505 = vadd.f32 %v498, %v502
  %510 = vrot.lane.b32.xlu0 %v285, 64
  %v511 = vpop.permute.xlu0 %510
  %512 = vrot.lane.b32.xlu0 %v286, 64
  %v513 = vpop.permute.xlu0 %512
  %514 = vrot.lane.b32.xlu0 %v287, 64
  %v515 = vpop.permute.xlu0 %514
  %516 = vrot.lane.b32.xlu0 %v288, 64
  %v517 = vpop.permute.xlu0 %516
  %518 = vrot.lane.b32.xlu0 %v289, 64
  %v519 = vpop.permute.xlu0 %518
  %520 = vrot.lane.b32.xlu0 %v290, 64
  %v521 = vpop.permute.xlu0 %520
  %522 = vrot.lane.b32.xlu0 %v291, 64
  %v523 = vpop.permute.xlu0 %522
  %524 = vrot.lane.b32.xlu0 %v292, 64
  %v525 = vpop.permute.xlu0 %524
  %vm526 = vcmask 523264
  %v527 = vsel %vm526, %v511, %v513
  %v528 = vsel %vm526, %v515, %v517
  %v529 = vsel %vm526, %v519, %v521
  %v530 = vsel %vm526, %v523, %v525
  %v536 = vsel %vm298, %v503, 0
  %v539 = vsel %vm298, %v504, 0
  %v542 = vsel %vm298, %v505, 0
  %544 = vmatprep.subr.mxu0 0.0
  %545 = vmatpush1.msra.mxu0 0.0
  %546 = vmatprep.subr.mxu0 0.0
  %547 = vmatpush1.msra.mxu0 0.0
  %548 = vmatprep.subr.mxu0 0.0
  %549 = vmatpush1.msra.mxu0 0.0
  %550 = vmatprep.subr.mxu0 0.0
  %551 = vmatpush1.msra.mxu0 0.0
  %552 = vmatprep.subr.mxu0 0.0
  %553 = vmatpush1.msra.mxu0 0.0
  %554 = vmatprep.subr.mxu0 0.0
  %555 = vmatpush1.msra.mxu0 0.0
  %556 = vmatprep.subr.mxu0 0.0
  %557 = vmatpush1.msra.mxu0 0.0
  %558 = vmatprep.subr.mxu0 0.0
  %559 = vmatpush1.msra.mxu0 0.0
  %560 = vmatprep.subr.mxu0 0.0
  %561 = vmatpush1.msra.mxu0 0.0
  %562 = vmatprep.subr.mxu0 0.0
  %563 = vmatpush1.msra.mxu0 0.0
  %564 = vmatprep.subr.mxu0 0.0
  %565 = vmatpush1.msra.mxu0 0.0
  %566 = vmatprep.subr.mxu0 0.0
  %567 = vmatpush1.msra.mxu0 0.0
  %568 = vmatprep.subr.mxu0 0.0
  %569 = vmatpush1.msra.mxu0 %v530
  %570 = vmatprep.subr.mxu0 0.0
  %571 = vmatpush1.msra.mxu0 %v529
  %572 = vmatprep.subr.mxu0 0.0
  %573 = vmatpush1.msra.mxu0 %v528
  %574 = vmatprep.subr.mxu0 0.0
  %575 = vmatpush1.msra.mxu0 %v527
  %576 = vmatprep.subr.mxu0 0.0
  %577 = vmatpush2.msra.mxu0 0.0
  %578 = vmatprep.subr.mxu0 0.0
  %579 = vmatpush2.msra.mxu0 0.0
  %580 = vmatprep.subr.mxu0 0.0
  %581 = vmatpush2.msra.mxu0 0.0
  %582 = vmatprep.subr.mxu0 0.0
  %583 = vmatpush2.msra.mxu0 0.0
  %584 = vmatprep.subr.mxu0 0.0
  %585 = vmatpush2.msra.mxu0 0.0
  %586 = vmatprep.subr.mxu0 0.0
  %587 = vmatpush2.msra.mxu0 0.0
  %588 = vmatprep.subr.mxu0 0.0
  %589 = vmatpush2.msra.mxu0 0.0
  %590 = vmatprep.subr.mxu0 0.0
  %591 = vmatpush2.msra.mxu0 0.0
  %592 = vmatprep.subr.mxu0 0.0
  %593 = vmatpush2.msra.mxu0 0.0
  %594 = vmatprep.subr.mxu0 0.0
  %595 = vmatpush2.msra.mxu0 0.0
  %596 = vmatprep.subr.mxu0 0.0
  %597 = vmatpush2.msra.mxu0 0.0
  %598 = vmatprep.subr.mxu0 0.0
  %599 = vmatpush2.msra.mxu0 0.0
  %600 = vmatprep.subr.mxu0 0.0
  %601 = vmatpush2.msra.mxu0 0.0
  %602 = vmatprep.subr.mxu0 0.0
  %603 = vmatpush2.msra.mxu0 0.0
  %604 = vmatprep.subr.mxu0 0.0
  %605 = vmatpush2.msra.mxu0 0.0
  %606 = vmatprep.subr.mxu0 0.0
  %607 = vmatpush2.msra.mxu0 0.0
  %608 = vmatprep.mubr.f32.mxu0 0.0
  %609 = vmatmul.mubr.f32.gmra.mxu0 %v536
  %v610 = vpop.f32.mrf.mxu0
  %v611 = vadd.f32 0.0, %v610
  %v612 = vpop.f32.mrf.mxu0
  %613 = vmatprep.mubr.f32.mxu0 0.0
  %614 = vmatmul.mubr.f32.gmra.mxu0 %v539
  %v615 = vpop.f32.mrf.mxu0
  %v616 = vadd.f32 0.0, %v615
  %v617 = vpop.f32.mrf.mxu0
  %618 = vmatprep.mubr.f32.mxu0 0.0
  %619 = vmatmul.mubr.f32.gmra.mxu0 %v542
  %v620 = vpop.f32.mrf.mxu0
  %v621 = vadd.f32 0.0, %v620
  %v622 = vpop.f32.mrf.mxu0
  %623 = vdwg.mxu0
  %627 = vrot.lane.b32.xlu0 %v611, 96
  %v628 = vpop.permute.xlu0 %627
  %629 = vrot.lane.b32.xlu0 %v616, 96
  %v630 = vpop.permute.xlu0 %629
  %631 = vrot.lane.b32.xlu0 %v621, 96
  %v632 = vpop.permute.xlu0 %631
  %vm633 = vcmask 130048
  %v634 = vsel %vm633, %v611, 0
  %v636 = vsel %vm633, %v616, 0
  %v638 = vsel %vm633, %v621, 0
  %v640 = vsel %vm633, %v628, 0
  %v642 = vsel %vm633, %v630, 0
  %v644 = vsel %vm633, %v632, 0
  %646 = vmatprep.subr.mxu0 0.0
  %647 = vmatpush1.xpose.msra.mxu0 0.0
  %648 = vmatprep.subr.mxu0 0.0
  %649 = vmatpush1.xpose.msra.mxu0 0.0
  %650 = vmatprep.subr.mxu0 0.0
  %651 = vmatpush1.xpose.msra.mxu0 0.0
  %652 = vmatprep.subr.mxu0 0.0
  %653 = vmatpush1.xpose.msra.mxu0 0.0
  %654 = vmatprep.subr.mxu0 0.0
  %655 = vmatpush1.xpose.msra.mxu0 0.0
  %656 = vmatprep.subr.mxu0 0.0
  %657 = vmatpush1.xpose.msra.mxu0 0.0
  %658 = vmatprep.subr.mxu0 0.0
  %659 = vmatpush1.xpose.msra.mxu0 0.0
  %660 = vmatprep.subr.mxu0 0.0
  %661 = vmatpush1.xpose.msra.mxu0 0.0
  %662 = vmatprep.subr.mxu0 0.0
  %663 = vmatpush1.xpose.msra.mxu0 0.0
  %664 = vmatprep.subr.mxu0 0.0
  %665 = vmatpush1.xpose.msra.mxu0 0.0
  %666 = vmatprep.subr.mxu0 0.0
  %667 = vmatpush1.xpose.msra.mxu0 0.0
  %668 = vmatprep.subr.mxu0 0.0
  %669 = vmatpush1.xpose.msra.mxu0 0.0
  %670 = vmatprep.subr.mxu0 0.0
  %671 = vmatpush1.xpose.msra.mxu0 0.0
  %672 = vmatprep.subr.mxu0 0.0
  %673 = vmatpush1.xpose.msra.mxu0 %v644
  %674 = vmatprep.subr.mxu0 0.0
  %675 = vmatpush1.xpose.msra.mxu0 %v642
  %676 = vmatprep.subr.mxu0 0.0
  %677 = vmatpush1.xpose.msra.mxu0 %v640
  %678 = vmatprep.subr.mxu0 0.0
  %679 = vmatpush2.xpose.msra.mxu0 0.0
  %680 = vmatprep.subr.mxu0 0.0
  %681 = vmatpush2.xpose.msra.mxu0 0.0
  %682 = vmatprep.subr.mxu0 0.0
  %683 = vmatpush2.xpose.msra.mxu0 0.0
  %684 = vmatprep.subr.mxu0 0.0
  %685 = vmatpush2.xpose.msra.mxu0 0.0
  %686 = vmatprep.subr.mxu0 0.0
  %687 = vmatpush2.xpose.msra.mxu0 0.0
  %688 = vmatprep.subr.mxu0 0.0
  %689 = vmatpush2.xpose.msra.mxu0 0.0
  %690 = vmatprep.subr.mxu0 0.0
  %691 = vmatpush2.xpose.msra.mxu0 0.0
  %692 = vmatprep.subr.mxu0 0.0
  %693 = vmatpush2.xpose.msra.mxu0 0.0
  %694 = vmatprep.subr.mxu0 0.0
  %695 = vmatpush2.xpose.msra.mxu0 0.0
  %696 = vmatprep.subr.mxu0 0.0
  %697 = vmatpush2.xpose.msra.mxu0 0.0
  %698 = vmatprep.subr.mxu0 0.0
  %699 = vmatpush2.xpose.msra.mxu0 0.0
  %700 = vmatprep.subr.mxu0 0.0
  %701 = vmatpush2.xpose.msra.mxu0 0.0
  %702 = vmatprep.subr.mxu0 0.0
  %703 = vmatpush2.xpose.msra.mxu0 0.0
  %704 = vmatprep.subr.mxu0 0.0
  %705 = vmatpush2.xpose.msra.mxu0 0.0
  %706 = vmatprep.subr.mxu0 0.0
  %707 = vmatpush2.xpose.msra.mxu0 0.0
  %708 = vmatprep.subr.mxu0 0.0
  %709 = vmatpush2.xpose.msra.mxu0 0.0
  %710 = vmatprep.mubr.f32.mxu0 0.0
  %711 = vmatmul.mubr.f32.gmra.mxu0 %v634
  %v712 = vpop.f32.mrf.mxu0
  %v713 = vadd.f32 0.0, %v712
  %v714 = vpop.f32.mrf.mxu0
  %715 = vmatprep.mubr.f32.mxu0 0.0
  %716 = vmatmul.mubr.f32.gmra.mxu0 %v636
  %v717 = vpop.f32.mrf.mxu0
  %v718 = vadd.f32 0.0, %v717
  %v719 = vpop.f32.mrf.mxu0
  %720 = vmatprep.mubr.f32.mxu0 0.0
  %721 = vmatmul.mubr.f32.gmra.mxu0 %v638
  %v722 = vpop.f32.mrf.mxu0
  %v723 = vadd.f32 0.0, %v722
  %v724 = vpop.f32.mrf.mxu0
  %725 = vdwg.mxu0
  %v726 = vmul.f32 %v713, 0.25
  %v727 = vmul.f32 %v718, 0.25
  %v728 = vmul.f32 %v723, 0.25
  %v729 = vadd.f32 %v726, %v282
  %v730 = vadd.f32 %v727, %v283
  %v731 = vadd.f32 %v728, %v284
  %vm732 = vcmask 195584
  %v733 = vsel %vm732, %v729, -inf
  %734 = vmax.xlane.f32.xlu0 %v733
  %v735 = vpop.xlane.xlu0 %734
  %v736 = vsel %vm732, %v730, -inf
  %737 = vmax.xlane.f32.xlu0 %v736
  %v738 = vpop.xlane.xlu0 %737
  %v739 = vsel %vm732, %v731, -inf
  %740 = vmax.xlane.f32.xlu0 %v739
  %v741 = vpop.xlane.xlu0 %740
  %v742 = vsub.f32 %v729, %v735
  %v743 = vsub.f32 %v730, %v738
  %v744 = vsub.f32 %v731, %v741
  %v745 = vmul.f32 %v742, 1.442695
  %v746 = vpow.pop %v745
  %v747 = vmul.f32 %v743, 1.442695
  %v748 = vpow.pop %v747
  %v749 = vmul.f32 %v744, 1.442695
  %v750 = vpow.pop %v749
  %v751 = vsel %vm732, %v746, 0.0
  %752 = vadd.xlane.f32.xlu0 %v751
  %v753 = vpop.xlane.xlu0 %752
  %v754 = vsel %vm732, %v748, 0.0
  %755 = vadd.xlane.f32.xlu0 %v754
  %v756 = vpop.xlane.xlu0 %755
  %v757 = vsel %vm732, %v750, 0.0
  %758 = vadd.xlane.f32.xlu0 %v757
  %v759 = vpop.xlane.xlu0 %758
  %v760 = vrcp.pop %v753
  %v761 = vrcp.pop %v756
  %v762 = vrcp.pop %v759
  %v763 = vmul.f32 %v746, %v760
  %v764 = vmul.f32 %v748, %v761
  %v765 = vmul.f32 %v750, %v762
  %766 = vrot.lane.b32.xlu0 %v611, 64
  %v767 = vpop.permute.xlu0 %766
  %768 = vrot.lane.b32.xlu0 %v616, 64
  %v769 = vpop.permute.xlu0 %768
  %770 = vrot.lane.b32.xlu0 %v621, 64
  %v771 = vpop.permute.xlu0 %770
  %v776 = vsel %vm732, %v763, 0
  %v779 = vsel %vm732, %v764, 0
  %v782 = vsel %vm732, %v765, 0
  %784 = vmatprep.subr.mxu0 0.0
  %785 = vmatpush1.msra.mxu0 0.0
  %786 = vmatprep.subr.mxu0 0.0
  %787 = vmatpush1.msra.mxu0 0.0
  %788 = vmatprep.subr.mxu0 0.0
  %789 = vmatpush1.msra.mxu0 0.0
  %790 = vmatprep.subr.mxu0 0.0
  %791 = vmatpush1.msra.mxu0 0.0
  %792 = vmatprep.subr.mxu0 0.0
  %793 = vmatpush1.msra.mxu0 0.0
  %794 = vmatprep.subr.mxu0 0.0
  %795 = vmatpush1.msra.mxu0 0.0
  %796 = vmatprep.subr.mxu0 0.0
  %797 = vmatpush1.msra.mxu0 0.0
  %798 = vmatprep.subr.mxu0 0.0
  %799 = vmatpush1.msra.mxu0 0.0
  %800 = vmatprep.subr.mxu0 0.0
  %801 = vmatpush1.msra.mxu0 0.0
  %802 = vmatprep.subr.mxu0 0.0
  %803 = vmatpush1.msra.mxu0 0.0
  %804 = vmatprep.subr.mxu0 0.0
  %805 = vmatpush1.msra.mxu0 0.0
  %806 = vmatprep.subr.mxu0 0.0
  %807 = vmatpush1.msra.mxu0 0.0
  %808 = vmatprep.subr.mxu0 0.0
  %809 = vmatpush1.msra.mxu0 0.0
  %810 = vmatprep.subr.mxu0 0.0
  %811 = vmatpush1.msra.mxu0 %v771
  %812 = vmatprep.subr.mxu0 0.0
  %813 = vmatpush1.msra.mxu0 %v769
  %814 = vmatprep.subr.mxu0 0.0
  %815 = vmatpush1.msra.mxu0 %v767
  %816 = vmatprep.subr.mxu0 0.0
  %817 = vmatpush2.msra.mxu0 0.0
  %818 = vmatprep.subr.mxu0 0.0
  %819 = vmatpush2.msra.mxu0 0.0
  %820 = vmatprep.subr.mxu0 0.0
  %821 = vmatpush2.msra.mxu0 0.0
  %822 = vmatprep.subr.mxu0 0.0
  %823 = vmatpush2.msra.mxu0 0.0
  %824 = vmatprep.subr.mxu0 0.0
  %825 = vmatpush2.msra.mxu0 0.0
  %826 = vmatprep.subr.mxu0 0.0
  %827 = vmatpush2.msra.mxu0 0.0
  %828 = vmatprep.subr.mxu0 0.0
  %829 = vmatpush2.msra.mxu0 0.0
  %830 = vmatprep.subr.mxu0 0.0
  %831 = vmatpush2.msra.mxu0 0.0
  %832 = vmatprep.subr.mxu0 0.0
  %833 = vmatpush2.msra.mxu0 0.0
  %834 = vmatprep.subr.mxu0 0.0
  %835 = vmatpush2.msra.mxu0 0.0
  %836 = vmatprep.subr.mxu0 0.0
  %837 = vmatpush2.msra.mxu0 0.0
  %838 = vmatprep.subr.mxu0 0.0
  %839 = vmatpush2.msra.mxu0 0.0
  %840 = vmatprep.subr.mxu0 0.0
  %841 = vmatpush2.msra.mxu0 0.0
  %842 = vmatprep.subr.mxu0 0.0
  %843 = vmatpush2.msra.mxu0 0.0
  %844 = vmatprep.subr.mxu0 0.0
  %845 = vmatpush2.msra.mxu0 0.0
  %846 = vmatprep.subr.mxu0 0.0
  %847 = vmatpush2.msra.mxu0 0.0
  %848 = vmatprep.mubr.f32.mxu0 0.0
  %849 = vmatmul.mubr.f32.gmra.mxu0 %v776
  %v850 = vpop.f32.mrf.mxu0
  %v851 = vadd.f32 0.0, %v850
  %v852 = vpop.f32.mrf.mxu0
  %853 = vmatprep.mubr.f32.mxu0 0.0
  %854 = vmatmul.mubr.f32.gmra.mxu0 %v779
  %v855 = vpop.f32.mrf.mxu0
  %v856 = vadd.f32 0.0, %v855
  %v857 = vpop.f32.mrf.mxu0
  %858 = vmatprep.mubr.f32.mxu0 0.0
  %859 = vmatmul.mubr.f32.gmra.mxu0 %v782
  %v860 = vpop.f32.mrf.mxu0
  %v861 = vadd.f32 0.0, %v860
  %v862 = vpop.f32.mrf.mxu0
  %863 = vdwg.mxu0
  %864 = vrot.lane.b32.xlu0 %v286, 96
  %v865 = vpop.permute.xlu0 %864
  %866 = vrot.lane.b32.xlu0 %v288, 96
  %v867 = vpop.permute.xlu0 %866
  %v871 = vsel %vm633, %v851, 0
  %v874 = vsel %vm633, %v856, 0
  %v877 = vsel %vm633, %v861, 0
  %879 = vmatprep.subr.mxu0 0.0
  %880 = vmatpush1.msra.mxu0 0.0
  %881 = vmatprep.subr.mxu0 0.0
  %882 = vmatpush1.msra.mxu0 0.0
  %883 = vmatprep.subr.mxu0 0.0
  %884 = vmatpush1.msra.mxu0 0.0
  %885 = vmatprep.subr.mxu0 0.0
  %886 = vmatpush1.msra.mxu0 0.0
  %887 = vmatprep.subr.mxu0 0.0
  %888 = vmatpush1.msra.mxu0 0.0
  %889 = vmatprep.subr.mxu0 0.0
  %890 = vmatpush1.msra.mxu0 0.0
  %891 = vmatprep.subr.mxu0 0.0
  %892 = vmatpush1.msra.mxu0 0.0
  %893 = vmatprep.subr.mxu0 0.0
  %894 = vmatpush1.msra.mxu0 0.0
  %895 = vmatprep.subr.mxu0 0.0
  %896 = vmatpush1.msra.mxu0 0.0
  %897 = vmatprep.subr.mxu0 0.0
  %898 = vmatpush1.msra.mxu0 0.0
  %899 = vmatprep.subr.mxu0 0.0
  %900 = vmatpush1.msra.mxu0 0.0
  %901 = vmatprep.subr.mxu0 0.0
  %902 = vmatpush1.msra.mxu0 0.0
  %903 = vmatprep.subr.mxu0 0.0
  %904 = vmatpush1.msra.mxu0 0.0
  %905 = vmatprep.subr.mxu0 0.0
  %906 = vmatpush1.msra.mxu0 0.0
  %907 = vmatprep.subr.mxu0 0.0
  %908 = vmatpush1.msra.mxu0 %v867
  %909 = vmatprep.subr.mxu0 0.0
  %910 = vmatpush1.msra.mxu0 %v865
  %911 = vmatprep.subr.mxu0 0.0
  %912 = vmatpush2.msra.mxu0 0.0
  %913 = vmatprep.subr.mxu0 0.0
  %914 = vmatpush2.msra.mxu0 0.0
  %915 = vmatprep.subr.mxu0 0.0
  %916 = vmatpush2.msra.mxu0 0.0
  %917 = vmatprep.subr.mxu0 0.0
  %918 = vmatpush2.msra.mxu0 0.0
  %919 = vmatprep.subr.mxu0 0.0
  %920 = vmatpush2.msra.mxu0 0.0
  %921 = vmatprep.subr.mxu0 0.0
  %922 = vmatpush2.msra.mxu0 0.0
  %923 = vmatprep.subr.mxu0 0.0
  %924 = vmatpush2.msra.mxu0 0.0
  %925 = vmatprep.subr.mxu0 0.0
  %926 = vmatpush2.msra.mxu0 0.0
  %927 = vmatprep.subr.mxu0 0.0
  %928 = vmatpush2.msra.mxu0 0.0
  %929 = vmatprep.subr.mxu0 0.0
  %930 = vmatpush2.msra.mxu0 0.0
  %931 = vmatprep.subr.mxu0 0.0
  %932 = vmatpush2.msra.mxu0 0.0
  %933 = vmatprep.subr.mxu0 0.0
  %934 = vmatpush2.msra.mxu0 0.0
  %935 = vmatprep.subr.mxu0 0.0
  %936 = vmatpush2.msra.mxu0 0.0
  %937 = vmatprep.subr.mxu0 0.0
  %938 = vmatpush2.msra.mxu0 0.0
  %939 = vmatprep.subr.mxu0 0.0
  %940 = vmatpush2.msra.mxu0 0.0
  %941 = vmatprep.subr.mxu0 0.0
  %942 = vmatpush2.msra.mxu0 0.0
  %943 = vmatprep.mubr.f32.mxu0 0.0
  %944 = vmatmul.mubr.f32.gmra.mxu0 %v871
  %v945 = vpop.f32.mrf.mxu0
  %v946 = vadd.f32 0.0, %v945
  %v947 = vpop.f32.mrf.mxu0
  %948 = vmatprep.mubr.f32.mxu0 0.0
  %949 = vmatmul.mubr.f32.gmra.mxu0 %v874
  %v950 = vpop.f32.mrf.mxu0
  %v951 = vadd.f32 0.0, %v950
  %v952 = vpop.f32.mrf.mxu0
  %953 = vmatprep.mubr.f32.mxu0 0.0
  %954 = vmatmul.mubr.f32.gmra.mxu0 %v877
  %v955 = vpop.f32.mrf.mxu0
  %v956 = vadd.f32 0.0, %v955
  %v957 = vpop.f32.mrf.mxu0
  %958 = vdwg.mxu0
  %v959 = vadd.f32 %v503, %v946
  %v960 = vadd.f32 %v504, %v951
  %v961 = vadd.f32 %v505, %v956
  %962 = vrot.lane.b32.xlu0 %v611, 112
  %v963 = vpop.permute.xlu0 %962
  %964 = vrot.lane.b32.xlu0 %v616, 112
  %v965 = vpop.permute.xlu0 %964
  %966 = vrot.lane.b32.xlu0 %v621, 112
  %v967 = vpop.permute.xlu0 %966
  %968 = vrot.lane.b32.xlu0 %v611, 80
  %v969 = vpop.permute.xlu0 %968
  %970 = vrot.lane.b32.xlu0 %v616, 80
  %v971 = vpop.permute.xlu0 %970
  %972 = vrot.lane.b32.xlu0 %v621, 80
  %v973 = vpop.permute.xlu0 %972
  %v974 = vsel %vm633, %v963, 0
  %v976 = vsel %vm633, %v965, 0
  %v978 = vsel %vm633, %v967, 0
  %v980 = vsel %vm633, %v969, 0
  %v982 = vsel %vm633, %v971, 0
  %v984 = vsel %vm633, %v973, 0
  %986 = vmatprep.subr.mxu0 0.0
  %987 = vmatpush1.xpose.msra.mxu0 0.0
  %988 = vmatprep.subr.mxu0 0.0
  %989 = vmatpush1.xpose.msra.mxu0 0.0
  %990 = vmatprep.subr.mxu0 0.0
  %991 = vmatpush1.xpose.msra.mxu0 0.0
  %992 = vmatprep.subr.mxu0 0.0
  %993 = vmatpush1.xpose.msra.mxu0 0.0
  %994 = vmatprep.subr.mxu0 0.0
  %995 = vmatpush1.xpose.msra.mxu0 0.0
  %996 = vmatprep.subr.mxu0 0.0
  %997 = vmatpush1.xpose.msra.mxu0 0.0
  %998 = vmatprep.subr.mxu0 0.0
  %999 = vmatpush1.xpose.msra.mxu0 0.0
  %1000 = vmatprep.subr.mxu0 0.0
  %1001 = vmatpush1.xpose.msra.mxu0 0.0
  %1002 = vmatprep.subr.mxu0 0.0
  %1003 = vmatpush1.xpose.msra.mxu0 0.0
  %1004 = vmatprep.subr.mxu0 0.0
  %1005 = vmatpush1.xpose.msra.mxu0 0.0
  %1006 = vmatprep.subr.mxu0 0.0
  %1007 = vmatpush1.xpose.msra.mxu0 0.0
  %1008 = vmatprep.subr.mxu0 0.0
  %1009 = vmatpush1.xpose.msra.mxu0 0.0
  %1010 = vmatprep.subr.mxu0 0.0
  %1011 = vmatpush1.xpose.msra.mxu0 0.0
  %1012 = vmatprep.subr.mxu0 0.0
  %1013 = vmatpush1.xpose.msra.mxu0 %v984
  %1014 = vmatprep.subr.mxu0 0.0
  %1015 = vmatpush1.xpose.msra.mxu0 %v982
  %1016 = vmatprep.subr.mxu0 0.0
  %1017 = vmatpush1.xpose.msra.mxu0 %v980
  %1018 = vmatprep.subr.mxu0 0.0
  %1019 = vmatpush2.xpose.msra.mxu0 0.0
  %1020 = vmatprep.subr.mxu0 0.0
  %1021 = vmatpush2.xpose.msra.mxu0 0.0
  %1022 = vmatprep.subr.mxu0 0.0
  %1023 = vmatpush2.xpose.msra.mxu0 0.0
  %1024 = vmatprep.subr.mxu0 0.0
  %1025 = vmatpush2.xpose.msra.mxu0 0.0
  %1026 = vmatprep.subr.mxu0 0.0
  %1027 = vmatpush2.xpose.msra.mxu0 0.0
  %1028 = vmatprep.subr.mxu0 0.0
  %1029 = vmatpush2.xpose.msra.mxu0 0.0
  %1030 = vmatprep.subr.mxu0 0.0
  %1031 = vmatpush2.xpose.msra.mxu0 0.0
  %1032 = vmatprep.subr.mxu0 0.0
  %1033 = vmatpush2.xpose.msra.mxu0 0.0
  %1034 = vmatprep.subr.mxu0 0.0
  %1035 = vmatpush2.xpose.msra.mxu0 0.0
  %1036 = vmatprep.subr.mxu0 0.0
  %1037 = vmatpush2.xpose.msra.mxu0 0.0
  %1038 = vmatprep.subr.mxu0 0.0
  %1039 = vmatpush2.xpose.msra.mxu0 0.0
  %1040 = vmatprep.subr.mxu0 0.0
  %1041 = vmatpush2.xpose.msra.mxu0 0.0
  %1042 = vmatprep.subr.mxu0 0.0
  %1043 = vmatpush2.xpose.msra.mxu0 0.0
  %1044 = vmatprep.subr.mxu0 0.0
  %1045 = vmatpush2.xpose.msra.mxu0 0.0
  %1046 = vmatprep.subr.mxu0 0.0
  %1047 = vmatpush2.xpose.msra.mxu0 0.0
  %1048 = vmatprep.subr.mxu0 0.0
  %1049 = vmatpush2.xpose.msra.mxu0 0.0
  %1050 = vmatprep.mubr.f32.mxu0 0.0
  %1051 = vmatmul.mubr.f32.gmra.mxu0 %v974
  %v1052 = vpop.f32.mrf.mxu0
  %v1053 = vadd.f32 0.0, %v1052
  %v1054 = vpop.f32.mrf.mxu0
  %1055 = vmatprep.mubr.f32.mxu0 0.0
  %1056 = vmatmul.mubr.f32.gmra.mxu0 %v976
  %v1057 = vpop.f32.mrf.mxu0
  %v1058 = vadd.f32 0.0, %v1057
  %v1059 = vpop.f32.mrf.mxu0
  %1060 = vmatprep.mubr.f32.mxu0 0.0
  %1061 = vmatmul.mubr.f32.gmra.mxu0 %v978
  %v1062 = vpop.f32.mrf.mxu0
  %v1063 = vadd.f32 0.0, %v1062
  %v1064 = vpop.f32.mrf.mxu0
  %1065 = vdwg.mxu0
  %v1066 = vmul.f32 %v1053, 0.25
  %v1067 = vmul.f32 %v1058, 0.25
  %v1068 = vmul.f32 %v1063, 0.25
  %v1069 = vadd.f32 %v1066, %v282
  %v1070 = vadd.f32 %v1067, %v283
  %v1071 = vadd.f32 %v1068, %v284
  %v1072 = vsel %vm732, %v1069, -inf
  %1073 = vmax.xlane.f32.xlu0 %v1072
  %v1074 = vpop.xlane.xlu0 %1073
  %v1075 = vsel %vm732, %v1070, -inf
  %1076 = vmax.xlane.f32.xlu0 %v1075
  %v1077 = vpop.xlane.xlu0 %1076
  %v1078 = vsel %vm732, %v1071, -inf
  %1079 = vmax.xlane.f32.xlu0 %v1078
  %v1080 = vpop.xlane.xlu0 %1079
  %v1081 = vsub.f32 %v1069, %v1074
  %v1082 = vsub.f32 %v1070, %v1077
  %v1083 = vsub.f32 %v1071, %v1080
  %v1084 = vmul.f32 %v1081, 1.442695
  %v1085 = vpow.pop %v1084
  %v1086 = vmul.f32 %v1082, 1.442695
  %v1087 = vpow.pop %v1086
  %v1088 = vmul.f32 %v1083, 1.442695
  %v1089 = vpow.pop %v1088
  %v1090 = vsel %vm732, %v1085, 0.0
  %1091 = vadd.xlane.f32.xlu0 %v1090
  %v1092 = vpop.xlane.xlu0 %1091
  %v1093 = vsel %vm732, %v1087, 0.0
  %1094 = vadd.xlane.f32.xlu0 %v1093
  %v1095 = vpop.xlane.xlu0 %1094
  %v1096 = vsel %vm732, %v1089, 0.0
  %1097 = vadd.xlane.f32.xlu0 %v1096
  %v1098 = vpop.xlane.xlu0 %1097
  %v1099 = vrcp.pop %v1092
  %v1100 = vrcp.pop %v1095
  %v1101 = vrcp.pop %v1098
  %v1102 = vmul.f32 %v1085, %v1099
  %v1103 = vmul.f32 %v1087, %v1100
  %v1104 = vmul.f32 %v1089, %v1101
  %1105 = vrot.lane.b32.xlu0 %v611, 48
  %v1106 = vpop.permute.xlu0 %1105
  %1107 = vrot.lane.b32.xlu0 %v616, 48
  %v1108 = vpop.permute.xlu0 %1107
  %1109 = vrot.lane.b32.xlu0 %v621, 48
  %v1110 = vpop.permute.xlu0 %1109
  %v1115 = vsel %vm732, %v1102, 0
  %v1118 = vsel %vm732, %v1103, 0
  %v1121 = vsel %vm732, %v1104, 0
  %1123 = vmatprep.subr.mxu0 0.0
  %1124 = vmatpush1.msra.mxu0 0.0
  %1125 = vmatprep.subr.mxu0 0.0
  %1126 = vmatpush1.msra.mxu0 0.0
  %1127 = vmatprep.subr.mxu0 0.0
  %1128 = vmatpush1.msra.mxu0 0.0
  %1129 = vmatprep.subr.mxu0 0.0
  %1130 = vmatpush1.msra.mxu0 0.0
  %1131 = vmatprep.subr.mxu0 0.0
  %1132 = vmatpush1.msra.mxu0 0.0
  %1133 = vmatprep.subr.mxu0 0.0
  %1134 = vmatpush1.msra.mxu0 0.0
  %1135 = vmatprep.subr.mxu0 0.0
  %1136 = vmatpush1.msra.mxu0 0.0
  %1137 = vmatprep.subr.mxu0 0.0
  %1138 = vmatpush1.msra.mxu0 0.0
  %1139 = vmatprep.subr.mxu0 0.0
  %1140 = vmatpush1.msra.mxu0 0.0
  %1141 = vmatprep.subr.mxu0 0.0
  %1142 = vmatpush1.msra.mxu0 0.0
  %1143 = vmatprep.subr.mxu0 0.0
  %1144 = vmatpush1.msra.mxu0 0.0
  %1145 = vmatprep.subr.mxu0 0.0
  %1146 = vmatpush1.msra.mxu0 0.0
  %1147 = vmatprep.subr.mxu0 0.0
  %1148 = vmatpush1.msra.mxu0 0.0
  %1149 = vmatprep.subr.mxu0 0.0
  %1150 = vmatpush1.msra.mxu0 %v1110
  %1151 = vmatprep.subr.mxu0 0.0
  %1152 = vmatpush1.msra.mxu0 %v1108
  %1153 = vmatprep.subr.mxu0 0.0
  %1154 = vmatpush1.msra.mxu0 %v1106
  %1155 = vmatprep.subr.mxu0 0.0
  %1156 = vmatpush2.msra.mxu0 0.0
  %1157 = vmatprep.subr.mxu0 0.0
  %1158 = vmatpush2.msra.mxu0 0.0
  %1159 = vmatprep.subr.mxu0 0.0
  %1160 = vmatpush2.msra.mxu0 0.0
  %1161 = vmatprep.subr.mxu0 0.0
  %1162 = vmatpush2.msra.mxu0 0.0
  %1163 = vmatprep.subr.mxu0 0.0
  %1164 = vmatpush2.msra.mxu0 0.0
  %1165 = vmatprep.subr.mxu0 0.0
  %1166 = vmatpush2.msra.mxu0 0.0
  %1167 = vmatprep.subr.mxu0 0.0
  %1168 = vmatpush2.msra.mxu0 0.0
  %1169 = vmatprep.subr.mxu0 0.0
  %1170 = vmatpush2.msra.mxu0 0.0
  %1171 = vmatprep.subr.mxu0 0.0
  %1172 = vmatpush2.msra.mxu0 0.0
  %1173 = vmatprep.subr.mxu0 0.0
  %1174 = vmatpush2.msra.mxu0 0.0
  %1175 = vmatprep.subr.mxu0 0.0
  %1176 = vmatpush2.msra.mxu0 0.0
  %1177 = vmatprep.subr.mxu0 0.0
  %1178 = vmatpush2.msra.mxu0 0.0
  %1179 = vmatprep.subr.mxu0 0.0
  %1180 = vmatpush2.msra.mxu0 0.0
  %1181 = vmatprep.subr.mxu0 0.0
  %1182 = vmatpush2.msra.mxu0 0.0
  %1183 = vmatprep.subr.mxu0 0.0
  %1184 = vmatpush2.msra.mxu0 0.0
  %1185 = vmatprep.subr.mxu0 0.0
  %1186 = vmatpush2.msra.mxu0 0.0
  %1187 = vmatprep.mubr.f32.mxu0 0.0
  %1188 = vmatmul.mubr.f32.gmra.mxu0 %v1115
  %v1189 = vpop.f32.mrf.mxu0
  %v1190 = vadd.f32 0.0, %v1189
  %v1191 = vpop.f32.mrf.mxu0
  %1192 = vmatprep.mubr.f32.mxu0 0.0
  %1193 = vmatmul.mubr.f32.gmra.mxu0 %v1118
  %v1194 = vpop.f32.mrf.mxu0
  %v1195 = vadd.f32 0.0, %v1194
  %v1196 = vpop.f32.mrf.mxu0
  %1197 = vmatprep.mubr.f32.mxu0 0.0
  %1198 = vmatmul.mubr.f32.gmra.mxu0 %v1121
  %v1199 = vpop.f32.mrf.mxu0
  %v1200 = vadd.f32 0.0, %v1199
  %v1201 = vpop.f32.mrf.mxu0
  %1202 = vdwg.mxu0
  %1203 = vrot.lane.b32.xlu0 %v290, 96
  %v1204 = vpop.permute.xlu0 %1203
  %1205 = vrot.lane.b32.xlu0 %v292, 96
  %v1206 = vpop.permute.xlu0 %1205
  %v1210 = vsel %vm633, %v1190, 0
  %v1213 = vsel %vm633, %v1195, 0
  %v1216 = vsel %vm633, %v1200, 0
  %1218 = vmatprep.subr.mxu0 0.0
  %1219 = vmatpush1.msra.mxu0 0.0
  %1220 = vmatprep.subr.mxu0 0.0
  %1221 = vmatpush1.msra.mxu0 0.0
  %1222 = vmatprep.subr.mxu0 0.0
  %1223 = vmatpush1.msra.mxu0 0.0
  %1224 = vmatprep.subr.mxu0 0.0
  %1225 = vmatpush1.msra.mxu0 0.0
  %1226 = vmatprep.subr.mxu0 0.0
  %1227 = vmatpush1.msra.mxu0 0.0
  %1228 = vmatprep.subr.mxu0 0.0
  %1229 = vmatpush1.msra.mxu0 0.0
  %1230 = vmatprep.subr.mxu0 0.0
  %1231 = vmatpush1.msra.mxu0 0.0
  %1232 = vmatprep.subr.mxu0 0.0
  %1233 = vmatpush1.msra.mxu0 0.0
  %1234 = vmatprep.subr.mxu0 0.0
  %1235 = vmatpush1.msra.mxu0 0.0
  %1236 = vmatprep.subr.mxu0 0.0
  %1237 = vmatpush1.msra.mxu0 0.0
  %1238 = vmatprep.subr.mxu0 0.0
  %1239 = vmatpush1.msra.mxu0 0.0
  %1240 = vmatprep.subr.mxu0 0.0
  %1241 = vmatpush1.msra.mxu0 0.0
  %1242 = vmatprep.subr.mxu0 0.0
  %1243 = vmatpush1.msra.mxu0 0.0
  %1244 = vmatprep.subr.mxu0 0.0
  %1245 = vmatpush1.msra.mxu0 0.0
  %1246 = vmatprep.subr.mxu0 0.0
  %1247 = vmatpush1.msra.mxu0 %v1206
  %1248 = vmatprep.subr.mxu0 0.0
  %1249 = vmatpush1.msra.mxu0 %v1204
  %1250 = vmatprep.subr.mxu0 0.0
  %1251 = vmatpush2.msra.mxu0 0.0
  %1252 = vmatprep.subr.mxu0 0.0
  %1253 = vmatpush2.msra.mxu0 0.0
  %1254 = vmatprep.subr.mxu0 0.0
  %1255 = vmatpush2.msra.mxu0 0.0
  %1256 = vmatprep.subr.mxu0 0.0
  %1257 = vmatpush2.msra.mxu0 0.0
  %1258 = vmatprep.subr.mxu0 0.0
  %1259 = vmatpush2.msra.mxu0 0.0
  %1260 = vmatprep.subr.mxu0 0.0
  %1261 = vmatpush2.msra.mxu0 0.0
  %1262 = vmatprep.subr.mxu0 0.0
  %1263 = vmatpush2.msra.mxu0 0.0
  %1264 = vmatprep.subr.mxu0 0.0
  %1265 = vmatpush2.msra.mxu0 0.0
  %1266 = vmatprep.subr.mxu0 0.0
  %1267 = vmatpush2.msra.mxu0 0.0
  %1268 = vmatprep.subr.mxu0 0.0
  %1269 = vmatpush2.msra.mxu0 0.0
  %1270 = vmatprep.subr.mxu0 0.0
  %1271 = vmatpush2.msra.mxu0 0.0
  %1272 = vmatprep.subr.mxu0 0.0
  %1273 = vmatpush2.msra.mxu0 0.0
  %1274 = vmatprep.subr.mxu0 0.0
  %1275 = vmatpush2.msra.mxu0 0.0
  %1276 = vmatprep.subr.mxu0 0.0
  %1277 = vmatpush2.msra.mxu0 0.0
  %1278 = vmatprep.subr.mxu0 0.0
  %1279 = vmatpush2.msra.mxu0 0.0
  %1280 = vmatprep.subr.mxu0 0.0
  %1281 = vmatpush2.msra.mxu0 0.0
  %1282 = vmatprep.mubr.f32.mxu0 0.0
  %1283 = vmatmul.mubr.f32.gmra.mxu0 %v1210
  %v1284 = vpop.f32.mrf.mxu0
  %v1285 = vadd.f32 0.0, %v1284
  %v1286 = vpop.f32.mrf.mxu0
  %1287 = vmatprep.mubr.f32.mxu0 0.0
  %1288 = vmatmul.mubr.f32.gmra.mxu0 %v1213
  %v1289 = vpop.f32.mrf.mxu0
  %v1290 = vadd.f32 0.0, %v1289
  %v1291 = vpop.f32.mrf.mxu0
  %1292 = vmatprep.mubr.f32.mxu0 0.0
  %1293 = vmatmul.mubr.f32.gmra.mxu0 %v1216
  %v1294 = vpop.f32.mrf.mxu0
  %v1295 = vadd.f32 0.0, %v1294
  %v1296 = vpop.f32.mrf.mxu0
  %1297 = vdwg.mxu0
  %v1298 = vadd.f32 %v959, %v1285
  %v1299 = vadd.f32 %v960, %v1290
  %v1300 = vadd.f32 %v961, %v1295
  %v1301 = vlaneseq
  %v1302 = vshrl.u32 %v1301, 7
  %v1303 = vsub.s32 2, %v1302
  %v1304 = vrot.slane %v293, %v1303
  %v1310 = vsel %vm298, %v1298, 0
  %v1313 = vsel %vm298, %v1299, 0
  %v1316 = vsel %vm298, %v1300, 0
  %1318 = vmatprep.subr.mxu0 0.0
  %1319 = vmatpush1.msra.mxu0 0.0
  %1320 = vmatprep.subr.mxu0 0.0
  %1321 = vmatpush1.msra.mxu0 0.0
  %1322 = vmatprep.subr.mxu0 0.0
  %1323 = vmatpush1.msra.mxu0 0.0
  %1324 = vmatprep.subr.mxu0 0.0
  %1325 = vmatpush1.msra.mxu0 0.0
  %1326 = vmatprep.subr.mxu0 0.0
  %1327 = vmatpush1.msra.mxu0 0.0
  %1328 = vmatprep.subr.mxu0 0.0
  %1329 = vmatpush1.msra.mxu0 0.0
  %1330 = vmatprep.subr.mxu0 0.0
  %1331 = vmatpush1.msra.mxu0 0.0
  %1332 = vmatprep.subr.mxu0 0.0
  %1333 = vmatpush1.msra.mxu0 0.0
  %1334 = vmatprep.subr.mxu0 0.0
  %1335 = vmatpush1.msra.mxu0 0.0
  %1336 = vmatprep.subr.mxu0 0.0
  %1337 = vmatpush1.msra.mxu0 0.0
  %1338 = vmatprep.subr.mxu0 0.0
  %1339 = vmatpush1.msra.mxu0 0.0
  %1340 = vmatprep.subr.mxu0 0.0
  %1341 = vmatpush1.msra.mxu0 0.0
  %1342 = vmatprep.subr.mxu0 0.0
  %1343 = vmatpush1.msra.mxu0 %v525
  %1344 = vmatprep.subr.mxu0 0.0
  %1345 = vmatpush1.msra.mxu0 %v521
  %1346 = vmatprep.subr.mxu0 0.0
  %1347 = vmatpush1.msra.mxu0 %v517
  %1348 = vmatprep.subr.mxu0 0.0
  %1349 = vmatpush1.msra.mxu0 %v513
  %1350 = vmatprep.subr.mxu0 0.0
  %1351 = vmatpush2.msra.mxu0 0.0
  %1352 = vmatprep.subr.mxu0 0.0
  %1353 = vmatpush2.msra.mxu0 0.0
  %1354 = vmatprep.subr.mxu0 0.0
  %1355 = vmatpush2.msra.mxu0 0.0
  %1356 = vmatprep.subr.mxu0 0.0
  %1357 = vmatpush2.msra.mxu0 0.0
  %1358 = vmatprep.subr.mxu0 0.0
  %1359 = vmatpush2.msra.mxu0 0.0
  %1360 = vmatprep.subr.mxu0 0.0
  %1361 = vmatpush2.msra.mxu0 0.0
  %1362 = vmatprep.subr.mxu0 0.0
  %1363 = vmatpush2.msra.mxu0 0.0
  %1364 = vmatprep.subr.mxu0 0.0
  %1365 = vmatpush2.msra.mxu0 0.0
  %1366 = vmatprep.subr.mxu0 0.0
  %1367 = vmatpush2.msra.mxu0 0.0
  %1368 = vmatprep.subr.mxu0 0.0
  %1369 = vmatpush2.msra.mxu0 0.0
  %1370 = vmatprep.subr.mxu0 0.0
  %1371 = vmatpush2.msra.mxu0 0.0
  %1372 = vmatprep.subr.mxu0 0.0
  %1373 = vmatpush2.msra.mxu0 0.0
  %1374 = vmatprep.subr.mxu0 0.0
  %1375 = vmatpush2.msra.mxu0 0.0
  %1376 = vmatprep.subr.mxu0 0.0
  %1377 = vmatpush2.msra.mxu0 0.0
  %1378 = vmatprep.subr.mxu0 0.0
  %1379 = vmatpush2.msra.mxu0 0.0
  %1380 = vmatprep.subr.mxu0 0.0
  %1381 = vmatpush2.msra.mxu0 0.0
  %1382 = vmatprep.mubr.f32.mxu0 0.0
  %1383 = vmatmul.mubr.f32.gmra.mxu0 %v1310
  %v1384 = vpop.f32.mrf.mxu0
  %v1385 = vadd.f32 %v1304, %v1384
  %v1386 = vpop.f32.mrf.mxu0
  %1387 = vmatprep.mubr.f32.mxu0 0.0
  %1388 = vmatmul.mubr.f32.gmra.mxu0 %v1313
  %v1389 = vpop.f32.mrf.mxu0
  %v1390 = vadd.f32 %v1304, %v1389
  %v1391 = vpop.f32.mrf.mxu0
  %1392 = vmatprep.mubr.f32.mxu0 0.0
  %1393 = vmatmul.mubr.f32.gmra.mxu0 %v1316
  %v1394 = vpop.f32.mrf.mxu0
  %v1395 = vadd.f32 %v1304, %v1394
  %v1396 = vpop.f32.mrf.mxu0
  %1397 = vdwg.mxu0
  %v1398 = vmax.f32 %v1385, 0.0
  %v1399 = vmax.f32 %v1390, 0.0
  %v1400 = vmax.f32 %v1395, 0.0
  %1401 = vrot.lane.b32.xlu0 %v286, 32
  %v1402 = vpop.permute.xlu0 %1401
  %1403 = vrot.lane.b32.xlu0 %v288, 32
  %v1404 = vpop.permute.xlu0 %1403
  %1405 = vrot.lane.b32.xlu0 %v290, 32
  %v1406 = vpop.permute.xlu0 %1405
  %1407 = vrot.lane.b32.xlu0 %v292, 32
  %v1408 = vpop.permute.xlu0 %1407
  %v1414 = vsel %vm298, %v1398, 0
  %v1417 = vsel %vm298, %v1399, 0
  %v1420 = vsel %vm298, %v1400, 0
  %1422 = vmatprep.subr.mxu0 0.0
  %1423 = vmatpush1.msra.mxu0 0.0
  %1424 = vmatprep.subr.mxu0 0.0
  %1425 = vmatpush1.msra.mxu0 0.0
  %1426 = vmatprep.subr.mxu0 0.0
  %1427 = vmatpush1.msra.mxu0 0.0
  %1428 = vmatprep.subr.mxu0 0.0
  %1429 = vmatpush1.msra.mxu0 0.0
  %1430 = vmatprep.subr.mxu0 0.0
  %1431 = vmatpush1.msra.mxu0 0.0
  %1432 = vmatprep.subr.mxu0 0.0
  %1433 = vmatpush1.msra.mxu0 0.0
  %1434 = vmatprep.subr.mxu0 0.0
  %1435 = vmatpush1.msra.mxu0 0.0
  %1436 = vmatprep.subr.mxu0 0.0
  %1437 = vmatpush1.msra.mxu0 0.0
  %1438 = vmatprep.subr.mxu0 0.0
  %1439 = vmatpush1.msra.mxu0 0.0
  %1440 = vmatprep.subr.mxu0 0.0
  %1441 = vmatpush1.msra.mxu0 0.0
  %1442 = vmatprep.subr.mxu0 0.0
  %1443 = vmatpush1.msra.mxu0 0.0
  %1444 = vmatprep.subr.mxu0 0.0
  %1445 = vmatpush1.msra.mxu0 0.0
  %1446 = vmatprep.subr.mxu0 0.0
  %1447 = vmatpush1.msra.mxu0 %v1408
  %1448 = vmatprep.subr.mxu0 0.0
  %1449 = vmatpush1.msra.mxu0 %v1406
  %1450 = vmatprep.subr.mxu0 0.0
  %1451 = vmatpush1.msra.mxu0 %v1404
  %1452 = vmatprep.subr.mxu0 0.0
  %1453 = vmatpush1.msra.mxu0 %v1402
  %1454 = vmatprep.subr.mxu0 0.0
  %1455 = vmatpush2.msra.mxu0 0.0
  %1456 = vmatprep.subr.mxu0 0.0
  %1457 = vmatpush2.msra.mxu0 0.0
  %1458 = vmatprep.subr.mxu0 0.0
  %1459 = vmatpush2.msra.mxu0 0.0
  %1460 = vmatprep.subr.mxu0 0.0
  %1461 = vmatpush2.msra.mxu0 0.0
  %1462 = vmatprep.subr.mxu0 0.0
  %1463 = vmatpush2.msra.mxu0 0.0
  %1464 = vmatprep.subr.mxu0 0.0
  %1465 = vmatpush2.msra.mxu0 0.0
  %1466 = vmatprep.subr.mxu0 0.0
  %1467 = vmatpush2.msra.mxu0 0.0
  %1468 = vmatprep.subr.mxu0 0.0
  %1469 = vmatpush2.msra.mxu0 0.0
  %1470 = vmatprep.subr.mxu0 0.0
  %1471 = vmatpush2.msra.mxu0 0.0
  %1472 = vmatprep.subr.mxu0 0.0
  %1473 = vmatpush2.msra.mxu0 0.0
  %1474 = vmatprep.subr.mxu0 0.0
  %1475 = vmatpush2.msra.mxu0 0.0
  %1476 = vmatprep.subr.mxu0 0.0
  %1477 = vmatpush2.msra.mxu0 0.0
  %1478 = vmatprep.subr.mxu0 0.0
  %1479 = vmatpush2.msra.mxu0 0.0
  %1480 = vmatprep.subr.mxu0 0.0
  %1481 = vmatpush2.msra.mxu0 0.0
  %1482 = vmatprep.subr.mxu0 0.0
  %1483 = vmatpush2.msra.mxu0 0.0
  %1484 = vmatprep.subr.mxu0 0.0
  %1485 = vmatpush2.msra.mxu0 0.0
  %1486 = vmatprep.mubr.f32.mxu0 0.0
  %1487 = vmatmul.mubr.f32.gmra.mxu0 %v1414
  %v1488 = vpop.f32.mrf.mxu0
  %v1489 = vadd.f32 0.0, %v1488
  %v1490 = vpop.f32.mrf.mxu0
  %1491 = vmatprep.mubr.f32.mxu0 0.0
  %1492 = vmatmul.mubr.f32.gmra.mxu0 %v1417
  %v1493 = vpop.f32.mrf.mxu0
  %v1494 = vadd.f32 0.0, %v1493
  %v1495 = vpop.f32.mrf.mxu0
  %1496 = vmatprep.mubr.f32.mxu0 0.0
  %1497 = vmatmul.mubr.f32.gmra.mxu0 %v1420
  %v1498 = vpop.f32.mrf.mxu0
  %v1499 = vadd.f32 0.0, %v1498
  %v1500 = vpop.f32.mrf.mxu0
  %1501 = vdwg.mxu0
  %v1502 = vadd.f32 %v1298, %v1489
  %v1503 = vadd.f32 %v1299, %v1494
  %v1504 = vadd.f32 %v1300, %v1499
  %v1505 = vlaneseq
  %v1506 = vshrl.u32 %v1505, 7
  %v1507 = vsub.s32 3, %v1506
  %v1508 = vrot.slane %v293, %v1507
  %v1509 = vadd.f32 %v1502, %v1508
  %v1510 = vadd.f32 %v1503, %v1508
  %v1511 = vadd.f32 %v1504, %v1508
  %v1512 = vld [vmem:[%s3] sm:$0xff]
  %v1513 = vld [vmem:[%s3 + $0x8] sm:$0xff]
  %v1514 = vld [vmem:[%s3 + $0x10] sm:$0xff]
  %v1515 = vmul.f32 %v1509, %v1512
  %v1516 = vmul.f32 %v1510, %v1513
  %v1517 = vmul.f32 %v1511, %v1514
  %1518 = vst.msk [vmem:[%s10] sm:$0xff] %vm298, %v1515
  %1519 = vst.msk [vmem:[%s10 + $0x8] sm:$0xff] %vm298, %v1516
  %1520 = vst.msk [vmem:[%s10 + $0x10] sm:$0xff] %vm298, %v1517
  %v1521 = vld [vmem:[%s8] sm:$0xff]
  %v1522 = vld [vmem:[%s8 + $0x8] sm:$0xff]
  %v1523 = vld [vmem:[%s8 + $0x10] sm:$0xff]
  %v1524 = vld [vmem:[%s8 + $0x18] sm:$0xff]
  %v1525 = vld [vmem:[%s8 + $0x20] sm:$0xff]
  %v1526 = vld [vmem:[%s8 + $0x28] sm:$0xff]
  %v1527 = vld [vmem:[%s8 + $0x30] sm:$0xff]
  %v1528 = vld [vmem:[%s8 + $0x38] sm:$0xff]
  %v1529 = vld [vmem:[%s8 + $0x40] sm:$0xff]
  %v1530 = vld [vmem:[%s8 + $0x48] sm:$0xff]
  %v1531 = vld [vmem:[%s8 + $0x50] sm:$0xff]
  %v1532 = vld [vmem:[%s8 + $0x58] sm:$0xff]
  %v1533 = vld [vmem:[%s8 + $0x60] sm:$0xff]
  %v1534 = vld [vmem:[%s8 + $0x68] sm:$0xff]
  %v1535 = vld [vmem:[%s8 + $0x70] sm:$0xff]
  %v1536 = vld [vmem:[%s8 + $0x78] sm:$0xff]
  %v1537 = vld [vmem:[%s8 + $0x80] sm:$0xff]
  %v1538 = vld [vmem:[%s8 + $0x88] sm:$0xff]
  %v1539 = vld [vmem:[%s8 + $0x90] sm:$0xff]
  %v1540 = vld [vmem:[%s8 + $0x98] sm:$0xff]
  %v1541 = vld [vmem:[%s8 + $0xa0] sm:$0xff]
  %v1542 = vld [vmem:[%s8 + $0xa8] sm:$0xff]
  %v1543 = vld [vmem:[%s8 + $0xb0] sm:$0xff]
  %v1544 = vld [vmem:[%s8 + $0xb8] sm:$0xff]
  %v1545 = vld [vmem:[%s8 + $0xc0] sm:$0xff]
  %v1546 = vld [vmem:[%s8 + $0xc8] sm:$0xff]
  %v1547 = vld [vmem:[%s8 + $0xd0] sm:$0xff]
  %v1548 = vld [vmem:[%s8 + $0xd8] sm:$0xff]
  %v1549 = vld [vmem:[%s8 + $0xe0] sm:$0xff]
  %v1550 = vld [vmem:[%s8 + $0xe8] sm:$0xff]
  %v1551 = vld [vmem:[%s8 + $0xf0] sm:$0xff]
  %v1552 = vld [vmem:[%s8 + $0xf8] sm:$0xff]
  %v1553 = vld [vmem:[%s8 + $0x100] sm:$0xff]
  %v1554 = vld [vmem:[%s8 + $0x108] sm:$0xff]
  %v1555 = vld [vmem:[%s8 + $0x110] sm:$0xff]
  %v1556 = vld [vmem:[%s8 + $0x118] sm:$0xff]
  %v1557 = vld [vmem:[%s8 + $0x120] sm:$0xff]
  %v1558 = vld [vmem:[%s8 + $0x128] sm:$0xff]
  %v1559 = vld [vmem:[%s8 + $0x130] sm:$0xff]
  %v1560 = vld [vmem:[%s8 + $0x138] sm:$0xff]
  %v1561 = vld [vmem:[%s8 + $0x140] sm:$0xff]
  %v1562 = vld [vmem:[%s8 + $0x148] sm:$0xff]
  %v1563 = vld [vmem:[%s8 + $0x150] sm:$0xff]
  %v1564 = vld [vmem:[%s8 + $0x158] sm:$0xff]
  %v1565 = vld [vmem:[%s8 + $0x160] sm:$0xff]
  %v1566 = vld [vmem:[%s8 + $0x168] sm:$0xff]
  %v1567 = vld [vmem:[%s8 + $0x170] sm:$0xff]
  %v1568 = vld [vmem:[%s8 + $0x178] sm:$0xff]
  %v1569 = vld [vmem:[%s8 + $0x180] sm:$0xff]
  %v1570 = vld [vmem:[%s8 + $0x188] sm:$0xff]
  %v1571 = vld [vmem:[%s8 + $0x190] sm:$0xff]
  %v1572 = vld [vmem:[%s8 + $0x198] sm:$0xff]
  %v1573 = vld [vmem:[%s8 + $0x1a0] sm:$0xff]
  %v1574 = vld [vmem:[%s8 + $0x1a8] sm:$0xff]
  %v1575 = vld [vmem:[%s8 + $0x1b0] sm:$0xff]
  %v1576 = vld [vmem:[%s8 + $0x1b8] sm:$0xff]
  %v1577 = vld [vmem:[%s8 + $0x1c0] sm:$0xff]
  %v1578 = vld [vmem:[%s8 + $0x1c8] sm:$0xff]
  %v1579 = vld [vmem:[%s8 + $0x1d0] sm:$0xff]
  %v1580 = vld [vmem:[%s8 + $0x1d8] sm:$0xff]
  %v1581 = vld [vmem:[%s9] sm:$0x1]
  %v1582 = vld [vmem:[%s9 + $0x1] sm:$0x1]
  %v1583 = vld [vmem:[%s9 + $0x2] sm:$0x1]
  %v1584 = vld [vmem:[%s4] sm:$0xff]
  %v1585 = vld [vmem:[%s4 + $0x8] sm:$0xf]
  %v1587 = vsel %vm298, %v1515, 0
  %v1590 = vsel %vm298, %v1516, 0
  %v1593 = vsel %vm298, %v1517, 0
  %1595 = vmatprep.subr.mxu0 0.0
  %1596 = vmatpush1.msra.mxu0 0.0
  %1597 = vmatprep.subr.mxu0 0.0
  %1598 = vmatpush1.msra.mxu0 0.0
  %1599 = vmatprep.subr.mxu0 0.0
  %1600 = vmatpush1.msra.mxu0 0.0
  %1601 = vmatprep.subr.mxu0 0.0
  %1602 = vmatpush1.msra.mxu0 0.0
  %1603 = vmatprep.subr.mxu0 0.0
  %1604 = vmatpush1.msra.mxu0 0.0
  %1605 = vmatprep.subr.mxu0 0.0
  %1606 = vmatpush1.msra.mxu0 0.0
  %1607 = vmatprep.subr.mxu0 0.0
  %1608 = vmatpush1.msra.mxu0 0.0
  %1609 = vmatprep.subr.mxu0 0.0
  %1610 = vmatpush1.msra.mxu0 0.0
  %1611 = vmatprep.subr.mxu0 0.0
  %1612 = vmatpush1.msra.mxu0 0.0
  %1613 = vmatprep.subr.mxu0 0.0
  %1614 = vmatpush1.msra.mxu0 0.0
  %1615 = vmatprep.subr.mxu0 0.0
  %1616 = vmatpush1.msra.mxu0 0.0
  %1617 = vmatprep.subr.mxu0 0.0
  %1618 = vmatpush1.msra.mxu0 0.0
  %1619 = vmatprep.subr.mxu0 0.0
  %1620 = vmatpush1.msra.mxu0 %v1524
  %1621 = vmatprep.subr.mxu0 0.0
  %1622 = vmatpush1.msra.mxu0 %v1523
  %1623 = vmatprep.subr.mxu0 0.0
  %1624 = vmatpush1.msra.mxu0 %v1522
  %1625 = vmatprep.subr.mxu0 0.0
  %1626 = vmatpush1.msra.mxu0 %v1521
  %1627 = vmatprep.subr.mxu0 0.0
  %1628 = vmatpush2.msra.mxu0 0.0
  %1629 = vmatprep.subr.mxu0 0.0
  %1630 = vmatpush2.msra.mxu0 0.0
  %1631 = vmatprep.subr.mxu0 0.0
  %1632 = vmatpush2.msra.mxu0 0.0
  %1633 = vmatprep.subr.mxu0 0.0
  %1634 = vmatpush2.msra.mxu0 0.0
  %1635 = vmatprep.subr.mxu0 0.0
  %1636 = vmatpush2.msra.mxu0 0.0
  %1637 = vmatprep.subr.mxu0 0.0
  %1638 = vmatpush2.msra.mxu0 0.0
  %1639 = vmatprep.subr.mxu0 0.0
  %1640 = vmatpush2.msra.mxu0 0.0
  %1641 = vmatprep.subr.mxu0 0.0
  %1642 = vmatpush2.msra.mxu0 0.0
  %1643 = vmatprep.subr.mxu0 0.0
  %1644 = vmatpush2.msra.mxu0 0.0
  %1645 = vmatprep.subr.mxu0 0.0
  %1646 = vmatpush2.msra.mxu0 0.0
  %1647 = vmatprep.subr.mxu0 0.0
  %1648 = vmatpush2.msra.mxu0 0.0
  %1649 = vmatprep.subr.mxu0 0.0
  %1650 = vmatpush2.msra.mxu0 0.0
  %1651 = vmatprep.subr.mxu0 0.0
  %1652 = vmatpush2.msra.mxu0 0.0
  %1653 = vmatprep.subr.mxu0 0.0
  %1654 = vmatpush2.msra.mxu0 0.0
  %1655 = vmatprep.subr.mxu0 0.0
  %1656 = vmatpush2.msra.mxu0 0.0
  %1657 = vmatprep.subr.mxu0 0.0
  %1658 = vmatpush2.msra.mxu0 0.0
  %1659 = vmatprep.mubr.f32.mxu0 0.0
  %1660 = vmatmul.mubr.f32.gmra.mxu0 %v1587
  %v1661 = vpop.f32.mrf.mxu0
  %v1662 = vadd.f32 0.0, %v1661
  %v1663 = vpop.f32.mrf.mxu0
  %1664 = vmatprep.mubr.f32.mxu0 0.0
  %1665 = vmatmul.mubr.f32.gmra.mxu0 %v1590
  %v1666 = vpop.f32.mrf.mxu0
  %v1667 = vadd.f32 0.0, %v1666
  %v1668 = vpop.f32.mrf.mxu0
  %1669 = vmatprep.mubr.f32.mxu0 0.0
  %1670 = vmatmul.mubr.f32.gmra.mxu0 %v1593
  %v1671 = vpop.f32.mrf.mxu0
  %v1672 = vadd.f32 0.0, %v1671
  %v1673 = vpop.f32.mrf.mxu0
  %1674 = vdwg.mxu0
  %v1675 = vlaneseq
  %v1676 = vshrl.u32 %v1675, 7
  %v1677 = vsub.s32 0, %v1676
  %v1678 = vrot.slane %v1581, %v1677
  %v1680 = vsel %vm732, %v1584, 0
  %1682 = vmatprep.subr.mxu0 0.0
  %1683 = vmatpush1.msra.mxu0 0.0
  %1684 = vmatprep.subr.mxu0 0.0
  %1685 = vmatpush1.msra.mxu0 0.0
  %1686 = vmatprep.subr.mxu0 0.0
  %1687 = vmatpush1.msra.mxu0 0.0
  %1688 = vmatprep.subr.mxu0 0.0
  %1689 = vmatpush1.msra.mxu0 0.0
  %1690 = vmatprep.subr.mxu0 0.0
  %1691 = vmatpush1.msra.mxu0 0.0
  %1692 = vmatprep.subr.mxu0 0.0
  %1693 = vmatpush1.msra.mxu0 0.0
  %1694 = vmatprep.subr.mxu0 0.0
  %1695 = vmatpush1.msra.mxu0 0.0
  %1696 = vmatprep.subr.mxu0 0.0
  %1697 = vmatpush1.msra.mxu0 0.0
  %1698 = vmatprep.subr.mxu0 0.0
  %1699 = vmatpush1.msra.mxu0 0.0
  %1700 = vmatprep.subr.mxu0 0.0
  %1701 = vmatpush1.msra.mxu0 0.0
  %1702 = vmatprep.subr.mxu0 0.0
  %1703 = vmatpush1.msra.mxu0 0.0
  %1704 = vmatprep.subr.mxu0 0.0
  %1705 = vmatpush1.msra.mxu0 0.0
  %1706 = vmatprep.subr.mxu0 0.0
  %1707 = vmatpush1.msra.mxu0 0.0
  %1708 = vmatprep.subr.mxu0 0.0
  %1709 = vmatpush1.msra.mxu0 %v1672
  %1710 = vmatprep.subr.mxu0 0.0
  %1711 = vmatpush1.msra.mxu0 %v1667
  %1712 = vmatprep.subr.mxu0 0.0
  %1713 = vmatpush1.msra.mxu0 %v1662
  %1714 = vmatprep.subr.mxu0 0.0
  %1715 = vmatpush2.msra.mxu0 0.0
  %1716 = vmatprep.subr.mxu0 0.0
  %1717 = vmatpush2.msra.mxu0 0.0
  %1718 = vmatprep.subr.mxu0 0.0
  %1719 = vmatpush2.msra.mxu0 0.0
  %1720 = vmatprep.subr.mxu0 0.0
  %1721 = vmatpush2.msra.mxu0 0.0
  %1722 = vmatprep.subr.mxu0 0.0
  %1723 = vmatpush2.msra.mxu0 0.0
  %1724 = vmatprep.subr.mxu0 0.0
  %1725 = vmatpush2.msra.mxu0 0.0
  %1726 = vmatprep.subr.mxu0 0.0
  %1727 = vmatpush2.msra.mxu0 0.0
  %1728 = vmatprep.subr.mxu0 0.0
  %1729 = vmatpush2.msra.mxu0 0.0
  %1730 = vmatprep.subr.mxu0 0.0
  %1731 = vmatpush2.msra.mxu0 0.0
  %1732 = vmatprep.subr.mxu0 0.0
  %1733 = vmatpush2.msra.mxu0 0.0
  %1734 = vmatprep.subr.mxu0 0.0
  %1735 = vmatpush2.msra.mxu0 0.0
  %1736 = vmatprep.subr.mxu0 0.0
  %1737 = vmatpush2.msra.mxu0 0.0
  %1738 = vmatprep.subr.mxu0 0.0
  %1739 = vmatpush2.msra.mxu0 0.0
  %1740 = vmatprep.subr.mxu0 0.0
  %1741 = vmatpush2.msra.mxu0 0.0
  %1742 = vmatprep.subr.mxu0 0.0
  %1743 = vmatpush2.msra.mxu0 0.0
  %1744 = vmatprep.subr.mxu0 0.0
  %1745 = vmatpush2.msra.mxu0 0.0
  %1746 = vmatprep.mubr.f32.mxu0 0.0
  %1747 = vmatmul.mubr.f32.gmra.mxu0 %v1680
  %v1748 = vpop.f32.mrf.mxu0
  %v1749 = vadd.f32 %v1678, %v1748
  %v1750 = vpop.f32.mrf.mxu0
  %1751 = vdwg.mxu0
  %v1752 = vmax.f32 %v1749, 0.0
  %v1754 = vsel %vm732, %v1585, 0
  %1756 = vmatprep.subr.mxu0 0.0
  %1757 = vmatpush1.msra.mxu0 0.0
  %1758 = vmatprep.subr.mxu0 0.0
  %1759 = vmatpush1.msra.mxu0 0.0
  %1760 = vmatprep.subr.mxu0 0.0
  %1761 = vmatpush1.msra.mxu0 0.0
  %1762 = vmatprep.subr.mxu0 0.0
  %1763 = vmatpush1.msra.mxu0 0.0
  %1764 = vmatprep.subr.mxu0 0.0
  %1765 = vmatpush1.msra.mxu0 0.0
  %1766 = vmatprep.subr.mxu0 0.0
  %1767 = vmatpush1.msra.mxu0 0.0
  %1768 = vmatprep.subr.mxu0 0.0
  %1769 = vmatpush1.msra.mxu0 0.0
  %1770 = vmatprep.subr.mxu0 0.0
  %1771 = vmatpush1.msra.mxu0 0.0
  %1772 = vmatprep.subr.mxu0 0.0
  %1773 = vmatpush1.msra.mxu0 0.0
  %1774 = vmatprep.subr.mxu0 0.0
  %1775 = vmatpush1.msra.mxu0 0.0
  %1776 = vmatprep.subr.mxu0 0.0
  %1777 = vmatpush1.msra.mxu0 0.0
  %1778 = vmatprep.subr.mxu0 0.0
  %1779 = vmatpush1.msra.mxu0 0.0
  %1780 = vmatprep.subr.mxu0 0.0
  %1781 = vmatpush1.msra.mxu0 0.0
  %1782 = vmatprep.subr.mxu0 0.0
  %1783 = vmatpush1.msra.mxu0 %v1517
  %1784 = vmatprep.subr.mxu0 0.0
  %1785 = vmatpush1.msra.mxu0 %v1516
  %1786 = vmatprep.subr.mxu0 0.0
  %1787 = vmatpush1.msra.mxu0 %v1515
  %1788 = vmatprep.subr.mxu0 0.0
  %1789 = vmatpush2.msra.mxu0 0.0
  %1790 = vmatprep.subr.mxu0 0.0
  %1791 = vmatpush2.msra.mxu0 0.0
  %1792 = vmatprep.subr.mxu0 0.0
  %1793 = vmatpush2.msra.mxu0 0.0
  %1794 = vmatprep.subr.mxu0 0.0
  %1795 = vmatpush2.msra.mxu0 0.0
  %1796 = vmatprep.subr.mxu0 0.0
  %1797 = vmatpush2.msra.mxu0 0.0
  %1798 = vmatprep.subr.mxu0 0.0
  %1799 = vmatpush2.msra.mxu0 0.0
  %1800 = vmatprep.subr.mxu0 0.0
  %1801 = vmatpush2.msra.mxu0 0.0
  %1802 = vmatprep.subr.mxu0 0.0
  %1803 = vmatpush2.msra.mxu0 0.0
  %1804 = vmatprep.subr.mxu0 0.0
  %1805 = vmatpush2.msra.mxu0 0.0
  %1806 = vmatprep.subr.mxu0 0.0
  %1807 = vmatpush2.msra.mxu0 0.0
  %1808 = vmatprep.subr.mxu0 0.0
  %1809 = vmatpush2.msra.mxu0 0.0
  %1810 = vmatprep.subr.mxu0 0.0
  %1811 = vmatpush2.msra.mxu0 0.0
  %1812 = vmatprep.subr.mxu0 0.0
  %1813 = vmatpush2.msra.mxu0 0.0
  %1814 = vmatprep.subr.mxu0 0.0
  %1815 = vmatpush2.msra.mxu0 0.0
  %1816 = vmatprep.subr.mxu0 0.0
  %1817 = vmatpush2.msra.mxu0 0.0
  %1818 = vmatprep.subr.mxu0 0.0
  %1819 = vmatpush2.msra.mxu0 0.0
  %1820 = vmatprep.mubr.f32.mxu0 0.0
  %1821 = vmatmul.mubr.f32.gmra.mxu0 %v1754
  %v1822 = vpop.f32.mrf.mxu0
  %v1823 = vadd.f32 0.0, %v1822
  %v1824 = vpop.f32.mrf.mxu0
  %1825 = vdwg.mxu0
  %v1826 = vlaneseq
  %v1827 = vshrl.u32 %v1826, 7
  %v1828 = vsub.s32 0, %v1827
  %v1829 = vrot.slane %v1582, %v1828
  %v1831 = vsel %vm298, %v1823, 0
  %1833 = vmatprep.subr.mxu0 0.0
  %1834 = vmatpush1.msra.mxu0 0.0
  %1835 = vmatprep.subr.mxu0 0.0
  %1836 = vmatpush1.msra.mxu0 0.0
  %1837 = vmatprep.subr.mxu0 0.0
  %1838 = vmatpush1.msra.mxu0 0.0
  %1839 = vmatprep.subr.mxu0 0.0
  %1840 = vmatpush1.msra.mxu0 0.0
  %1841 = vmatprep.subr.mxu0 0.0
  %1842 = vmatpush1.msra.mxu0 0.0
  %1843 = vmatprep.subr.mxu0 0.0
  %1844 = vmatpush1.msra.mxu0 0.0
  %1845 = vmatprep.subr.mxu0 0.0
  %1846 = vmatpush1.msra.mxu0 0.0
  %1847 = vmatprep.subr.mxu0 0.0
  %1848 = vmatpush1.msra.mxu0 0.0
  %1849 = vmatprep.subr.mxu0 0.0
  %1850 = vmatpush1.msra.mxu0 0.0
  %1851 = vmatprep.subr.mxu0 0.0
  %1852 = vmatpush1.msra.mxu0 0.0
  %1853 = vmatprep.subr.mxu0 0.0
  %1854 = vmatpush1.msra.mxu0 0.0
  %1855 = vmatprep.subr.mxu0 0.0
  %1856 = vmatpush1.msra.mxu0 0.0
  %1857 = vmatprep.subr.mxu0 0.0
  %1858 = vmatpush1.msra.mxu0 %v1528
  %1859 = vmatprep.subr.mxu0 0.0
  %1860 = vmatpush1.msra.mxu0 %v1527
  %1861 = vmatprep.subr.mxu0 0.0
  %1862 = vmatpush1.msra.mxu0 %v1526
  %1863 = vmatprep.subr.mxu0 0.0
  %1864 = vmatpush1.msra.mxu0 %v1525
  %1865 = vmatprep.subr.mxu0 0.0
  %1866 = vmatpush2.msra.mxu0 0.0
  %1867 = vmatprep.subr.mxu0 0.0
  %1868 = vmatpush2.msra.mxu0 0.0
  %1869 = vmatprep.subr.mxu0 0.0
  %1870 = vmatpush2.msra.mxu0 0.0
  %1871 = vmatprep.subr.mxu0 0.0
  %1872 = vmatpush2.msra.mxu0 0.0
  %1873 = vmatprep.subr.mxu0 0.0
  %1874 = vmatpush2.msra.mxu0 0.0
  %1875 = vmatprep.subr.mxu0 0.0
  %1876 = vmatpush2.msra.mxu0 0.0
  %1877 = vmatprep.subr.mxu0 0.0
  %1878 = vmatpush2.msra.mxu0 0.0
  %1879 = vmatprep.subr.mxu0 0.0
  %1880 = vmatpush2.msra.mxu0 0.0
  %1881 = vmatprep.subr.mxu0 0.0
  %1882 = vmatpush2.msra.mxu0 0.0
  %1883 = vmatprep.subr.mxu0 0.0
  %1884 = vmatpush2.msra.mxu0 0.0
  %1885 = vmatprep.subr.mxu0 0.0
  %1886 = vmatpush2.msra.mxu0 0.0
  %1887 = vmatprep.subr.mxu0 0.0
  %1888 = vmatpush2.msra.mxu0 0.0
  %1889 = vmatprep.subr.mxu0 0.0
  %1890 = vmatpush2.msra.mxu0 0.0
  %1891 = vmatprep.subr.mxu0 0.0
  %1892 = vmatpush2.msra.mxu0 0.0
  %1893 = vmatprep.subr.mxu0 0.0
  %1894 = vmatpush2.msra.mxu0 0.0
  %1895 = vmatprep.subr.mxu0 0.0
  %1896 = vmatpush2.msra.mxu0 0.0
  %1897 = vmatprep.mubr.f32.mxu0 0.0
  %1898 = vmatmul.mubr.f32.gmra.mxu0 %v1831
  %v1899 = vpop.f32.mrf.mxu0
  %v1900 = vadd.f32 %v1829, %v1899
  %v1901 = vpop.f32.mrf.mxu0
  %1902 = vdwg.mxu0
  %v1903 = vxor.u32 %v1900, 2147483648
  %v1904 = vmul.f32 %v1903, 1.442695
  %v1905 = vpow.pop %v1904
  %v1906 = vadd.f32 %v1905, 1.0
  %v1907 = vrcp.pop %v1906
  %v1908 = vmul.f32 1.0, %v1907
  %v1909 = vld [vmem:[%s1] sm:$0xff]
  %v1910 = vld [vmem:[%s1 + $0x8] sm:$0xf]
  %v1913 = vcombine.high %v1909, %v1909
  %v1915 = vsel %vm298, %v1910, 0
  %1917 = vmatprep.subr.mxu0 0.0
  %1918 = vmatpush1.msra.mxu0 %v1544
  %1919 = vmatprep.subr.mxu0 0.0
  %1920 = vmatpush1.msra.mxu0 %v1543
  %1921 = vmatprep.subr.mxu0 0.0
  %1922 = vmatpush1.msra.mxu0 %v1542
  %1923 = vmatprep.subr.mxu0 0.0
  %1924 = vmatpush1.msra.mxu0 %v1541
  %1925 = vmatprep.subr.mxu0 0.0
  %1926 = vmatpush1.msra.mxu0 %v1540
  %1927 = vmatprep.subr.mxu0 0.0
  %1928 = vmatpush1.msra.mxu0 %v1539
  %1929 = vmatprep.subr.mxu0 0.0
  %1930 = vmatpush1.msra.mxu0 %v1538
  %1931 = vmatprep.subr.mxu0 0.0
  %1932 = vmatpush1.msra.mxu0 %v1537
  %1933 = vmatprep.subr.mxu0 0.0
  %1934 = vmatpush1.msra.mxu0 %v1536
  %1935 = vmatprep.subr.mxu0 0.0
  %1936 = vmatpush1.msra.mxu0 %v1535
  %1937 = vmatprep.subr.mxu0 0.0
  %1938 = vmatpush1.msra.mxu0 %v1534
  %1939 = vmatprep.subr.mxu0 0.0
  %1940 = vmatpush1.msra.mxu0 %v1533
  %1941 = vmatprep.subr.mxu0 0.0
  %1942 = vmatpush1.msra.mxu0 %v1532
  %1943 = vmatprep.subr.mxu0 0.0
  %1944 = vmatpush1.msra.mxu0 %v1531
  %1945 = vmatprep.subr.mxu0 0.0
  %1946 = vmatpush1.msra.mxu0 %v1530
  %1947 = vmatprep.subr.mxu0 0.0
  %1948 = vmatpush1.msra.mxu0 %v1529
  %1949 = vmatprep.subr.mxu0 0.0
  %1950 = vmatpush2.msra.mxu0 %v1560
  %1951 = vmatprep.subr.mxu0 0.0
  %1952 = vmatpush2.msra.mxu0 %v1559
  %1953 = vmatprep.subr.mxu0 0.0
  %1954 = vmatpush2.msra.mxu0 %v1558
  %1955 = vmatprep.subr.mxu0 0.0
  %1956 = vmatpush2.msra.mxu0 %v1557
  %1957 = vmatprep.subr.mxu0 0.0
  %1958 = vmatpush2.msra.mxu0 %v1556
  %1959 = vmatprep.subr.mxu0 0.0
  %1960 = vmatpush2.msra.mxu0 %v1555
  %1961 = vmatprep.subr.mxu0 0.0
  %1962 = vmatpush2.msra.mxu0 %v1554
  %1963 = vmatprep.subr.mxu0 0.0
  %1964 = vmatpush2.msra.mxu0 %v1553
  %1965 = vmatprep.subr.mxu0 0.0
  %1966 = vmatpush2.msra.mxu0 %v1552
  %1967 = vmatprep.subr.mxu0 0.0
  %1968 = vmatpush2.msra.mxu0 %v1551
  %1969 = vmatprep.subr.mxu0 0.0
  %1970 = vmatpush2.msra.mxu0 %v1550
  %1971 = vmatprep.subr.mxu0 0.0
  %1972 = vmatpush2.msra.mxu0 %v1549
  %1973 = vmatprep.subr.mxu0 0.0
  %1974 = vmatpush2.msra.mxu0 %v1548
  %1975 = vmatprep.subr.mxu0 0.0
  %1976 = vmatpush2.msra.mxu0 %v1547
  %1977 = vmatprep.subr.mxu0 0.0
  %1978 = vmatpush2.msra.mxu0 %v1546
  %1979 = vmatprep.subr.mxu0 0.0
  %1980 = vmatpush2.msra.mxu0 %v1545
  %1981 = vmatprep.mubr.f32.mxu0 %v1913
  %1982 = vmatmul.mubr.f32.gmra.mxu0 %v1909
  %v1983 = vpop.f32.mrf.mxu0
  %v1984 = vadd.f32 0.0, %v1983
  %v1985 = vpop.f32.mrf.mxu0
  %1986 = vdwg.mxu0
  %1987 = vmatprep.subr.mxu0 0.0
  %1988 = vmatpush1.msra.mxu0 0.0
  %1989 = vmatprep.subr.mxu0 0.0
  %1990 = vmatpush1.msra.mxu0 0.0
  %1991 = vmatprep.subr.mxu0 0.0
  %1992 = vmatpush1.msra.mxu0 0.0
  %1993 = vmatprep.subr.mxu0 0.0
  %1994 = vmatpush1.msra.mxu0 0.0
  %1995 = vmatprep.subr.mxu0 0.0
  %1996 = vmatpush1.msra.mxu0 0.0
  %1997 = vmatprep.subr.mxu0 0.0
  %1998 = vmatpush1.msra.mxu0 0.0
  %1999 = vmatprep.subr.mxu0 0.0
  %2000 = vmatpush1.msra.mxu0 0.0
  %2001 = vmatprep.subr.mxu0 0.0
  %2002 = vmatpush1.msra.mxu0 0.0
  %2003 = vmatprep.subr.mxu0 0.0
  %2004 = vmatpush1.msra.mxu0 0.0
  %2005 = vmatprep.subr.mxu0 0.0
  %2006 = vmatpush1.msra.mxu0 0.0
  %2007 = vmatprep.subr.mxu0 0.0
  %2008 = vmatpush1.msra.mxu0 0.0
  %2009 = vmatprep.subr.mxu0 0.0
  %2010 = vmatpush1.msra.mxu0 0.0
  %2011 = vmatprep.subr.mxu0 0.0
  %2012 = vmatpush1.msra.mxu0 %v1564
  %2013 = vmatprep.subr.mxu0 0.0
  %2014 = vmatpush1.msra.mxu0 %v1563
  %2015 = vmatprep.subr.mxu0 0.0
  %2016 = vmatpush1.msra.mxu0 %v1562
  %2017 = vmatprep.subr.mxu0 0.0
  %2018 = vmatpush1.msra.mxu0 %v1561
  %2019 = vmatprep.subr.mxu0 0.0
  %2020 = vmatpush2.msra.mxu0 0.0
  %2021 = vmatprep.subr.mxu0 0.0
  %2022 = vmatpush2.msra.mxu0 0.0
  %2023 = vmatprep.subr.mxu0 0.0
  %2024 = vmatpush2.msra.mxu0 0.0
  %2025 = vmatprep.subr.mxu0 0.0
  %2026 = vmatpush2.msra.mxu0 0.0
  %2027 = vmatprep.subr.mxu0 0.0
  %2028 = vmatpush2.msra.mxu0 0.0
  %2029 = vmatprep.subr.mxu0 0.0
  %2030 = vmatpush2.msra.mxu0 0.0
  %2031 = vmatprep.subr.mxu0 0.0
  %2032 = vmatpush2.msra.mxu0 0.0
  %2033 = vmatprep.subr.mxu0 0.0
  %2034 = vmatpush2.msra.mxu0 0.0
  %2035 = vmatprep.subr.mxu0 0.0
  %2036 = vmatpush2.msra.mxu0 0.0
  %2037 = vmatprep.subr.mxu0 0.0
  %2038 = vmatpush2.msra.mxu0 0.0
  %2039 = vmatprep.subr.mxu0 0.0
  %2040 = vmatpush2.msra.mxu0 0.0
  %2041 = vmatprep.subr.mxu0 0.0
  %2042 = vmatpush2.msra.mxu0 0.0
  %2043 = vmatprep.subr.mxu0 0.0
  %2044 = vmatpush2.msra.mxu0 0.0
  %2045 = vmatprep.subr.mxu0 0.0
  %2046 = vmatpush2.msra.mxu0 0.0
  %2047 = vmatprep.subr.mxu0 0.0
  %2048 = vmatpush2.msra.mxu0 0.0
  %2049 = vmatprep.subr.mxu0 0.0
  %2050 = vmatpush2.msra.mxu0 0.0
  %2051 = vmatprep.mubr.f32.mxu0 0.0
  %2052 = vmatmul.mubr.f32.gmra.mxu0 %v1915
  %v2053 = vpop.f32.mrf.mxu0
  %v2054 = vadd.f32 %v1984, %v2053
  %v2055 = vpop.f32.mrf.mxu0
  %2056 = vdwg.mxu0
  %v2057 = vmul.f32 %v1908, %v2054
  %v2058 = vlaneseq
  %v2059 = vshrl.u32 %v2058, 7
  %v2060 = vsub.s32 0, %v2059
  %v2061 = vrot.slane %v1583, %v2060
  %2062 = vmatprep.subr.mxu0 0.0
  %2063 = vmatpush1.msra.mxu0 %v1580
  %2064 = vmatprep.subr.mxu0 0.0
  %2065 = vmatpush1.msra.mxu0 %v1579
  %2066 = vmatprep.subr.mxu0 0.0
  %2067 = vmatpush1.msra.mxu0 %v1578
  %2068 = vmatprep.subr.mxu0 0.0
  %2069 = vmatpush1.msra.mxu0 %v1577
  %2070 = vmatprep.subr.mxu0 0.0
  %2071 = vmatpush1.msra.mxu0 %v1576
  %2072 = vmatprep.subr.mxu0 0.0
  %2073 = vmatpush1.msra.mxu0 %v1575
  %2074 = vmatprep.subr.mxu0 0.0
  %2075 = vmatpush1.msra.mxu0 %v1574
  %2076 = vmatprep.subr.mxu0 0.0
  %2077 = vmatpush1.msra.mxu0 %v1573
  %2078 = vmatprep.subr.mxu0 0.0
  %2079 = vmatpush1.msra.mxu0 %v1572
  %2080 = vmatprep.subr.mxu0 0.0
  %2081 = vmatpush1.msra.mxu0 %v1571
  %2082 = vmatprep.subr.mxu0 0.0
  %2083 = vmatpush1.msra.mxu0 %v1570
  %2084 = vmatprep.subr.mxu0 0.0
  %2085 = vmatpush1.msra.mxu0 %v1569
  %2086 = vmatprep.subr.mxu0 0.0
  %2087 = vmatpush1.msra.mxu0 %v1568
  %2088 = vmatprep.subr.mxu0 0.0
  %2089 = vmatpush1.msra.mxu0 %v1567
  %2090 = vmatprep.subr.mxu0 0.0
  %2091 = vmatpush1.msra.mxu0 %v1566
  %2092 = vmatprep.subr.mxu0 0.0
  %2093 = vmatpush1.msra.mxu0 %v1565
  %2094 = vmatprep.subr.mxu0 0.0
  %2095 = vmatpush2.msra.mxu0 0.0
  %2096 = vmatprep.subr.mxu0 0.0
  %2097 = vmatpush2.msra.mxu0 0.0
  %2098 = vmatprep.subr.mxu0 0.0
  %2099 = vmatpush2.msra.mxu0 0.0
  %2100 = vmatprep.subr.mxu0 0.0
  %2101 = vmatpush2.msra.mxu0 0.0
  %2102 = vmatprep.subr.mxu0 0.0
  %2103 = vmatpush2.msra.mxu0 0.0
  %2104 = vmatprep.subr.mxu0 0.0
  %2105 = vmatpush2.msra.mxu0 0.0
  %2106 = vmatprep.subr.mxu0 0.0
  %2107 = vmatpush2.msra.mxu0 0.0
  %2108 = vmatprep.subr.mxu0 0.0
  %2109 = vmatpush2.msra.mxu0 0.0
  %2110 = vmatprep.subr.mxu0 0.0
  %2111 = vmatpush2.msra.mxu0 0.0
  %2112 = vmatprep.subr.mxu0 0.0
  %2113 = vmatpush2.msra.mxu0 0.0
  %2114 = vmatprep.subr.mxu0 0.0
  %2115 = vmatpush2.msra.mxu0 0.0
  %2116 = vmatprep.subr.mxu0 0.0
  %2117 = vmatpush2.msra.mxu0 0.0
  %2118 = vmatprep.subr.mxu0 0.0
  %2119 = vmatpush2.msra.mxu0 0.0
  %2120 = vmatprep.subr.mxu0 0.0
  %2121 = vmatpush2.msra.mxu0 0.0
  %2122 = vmatprep.subr.mxu0 0.0
  %2123 = vmatpush2.msra.mxu0 0.0
  %2124 = vmatprep.subr.mxu0 0.0
  %2125 = vmatpush2.msra.mxu0 0.0
  %2126 = vmatprep.mubr.f32.mxu0 0.0
  %2127 = vmatmul.mubr.f32.gmra.mxu0 %v2057
  %v2128 = vpop.f32.mrf.mxu0
  %v2129 = vadd.f32 %v2061, %v2128
  %v2130 = vpop.f32.mrf.mxu0
  %2131 = vdwg.mxu0
  %2132 = vst [vmem:[%s11] sm:$0xff] %v1752
  %2133 = vst [vmem:[%s11 + $0x8] sm:$0xf] %v2129
  // Predicated region
  $region42: #{private_encoder_forward.1} parent=0 // pred_check
    _
  $region43: #{private_encoder_forward.1} parent=0 // pred_check_branch
    %2135 = sbr.rel (0) target = $region45
  $region44: #{private_encoder_forward.1} parent=0 // pred_region
    _
  $region45: #{private_encoder_forward.1} parent=0 // pred_fallthru
    _
  // Predicated region
  $region46: #{private_encoder_forward.1} parent=0 // pred_check
    _
  $region47: #{private_encoder_forward.1} parent=0 // pred_check_branch
    %2137 = sbr.rel (0) target = $region49
  $region48: #{private_encoder_forward.1} parent=0 // pred_region
    _
  $region49: #{private_encoder_forward.1} parent=0 // pred_fallthru
    _
  // Predicated region
  $region50: #{private_encoder_forward.1} parent=0 // pred_check
    _
  $region51: #{private_encoder_forward.1} parent=0 // pred_check_branch
    %2139 = sbr.rel (0) target = $region53
  $region52: #{private_encoder_forward.1} parent=0 // pred_region
    _
  $region53: #{private_encoder_forward.1} parent=0 // pred_fallthru
    _
  // Predicated region
  $region54: #{private_encoder_forward.1} parent=0 // pred_check
    _
  $region55: #{private_encoder_forward.1} parent=0 // pred_check_branch
    %2141 = sbr.rel (0) target = $region57
  $region56: #{private_encoder_forward.1} parent=0 // pred_region
    _
  $region57: #{private_encoder_forward.1} parent=0 // pred_fallthru
    _

</llo_original>
